<compile_context>
chip_gen: v5e
topology: v5e:2x2
jax: 0.10.0
libtpu: 0.0.40
codegen_flags: <defaults>
</compile_context>

<pallas_src>
import functools

import jax
import jax.numpy as jnp
from jax import lax
from jax.experimental import pallas as pl
from jax.experimental.pallas import tpu as pltpu

NEG_SLOPE = 0.01  # torch.nn.LeakyReLU default


def _round_up(v, m):
    return (v + m - 1) // m * m


def _lrelu(x):
    return jnp.where(x > 0, x, NEG_SLOPE * x)


# ---------------------------------------------------------------------------
# Fused ResBlock kernel: one (batch, L-tile) grid step computes the whole
# residual sum for that tile.
# ---------------------------------------------------------------------------
def _resblock_kernel(x_hbm, w1_hbm, w2_hbm, b1_ref, b2s_ref, o_ref,
                     xbuf, w1_vmem, w2_vmem, acc_ref, xsem, wsem, *,
                     dilations, K, L_real, L_TILE, NUM_L, HL, Wpad,
                     compute_dtype, ew_dtype):
    # x_hbm   : (N, C, Xlen)  zero-padded input, left in HBM (pl.ANY)
    # w?_hbm  : (nblocks*K, C, C) tap-major weights in HBM (pl.ANY)
    # b1_ref  : (nblocks, C, 1)   conv1 biases (elementwise dtype)
    # b2s_ref : (C, 1)            sum of conv2 biases (f32, hoisted)
    # o_ref   : (1, C, L_TILE)    output tile
    # xbuf    : (2, C, Wpad)      double-buffered halo'd input window
    # w?_vmem : (nblocks*K, C, C) single-buffered VMEM copy of the weights
    # acc_ref : (C, L_TILE) f32   explicit block-sum accumulator
    n = pl.program_id(0)
    l = pl.program_id(1)
    pad_l2 = (K - 1) // 2
    L1 = L_TILE + (K - 1)                   # intermediate needs conv2's halo

    def xdma(n_idx, l_idx, slot_idx):
        start = pl.multiple_of(l_idx * L_TILE, 128)
        return pltpu.make_async_copy(
            x_hbm.at[n_idx, :, pl.ds(start, Wpad)],
            xbuf.at[slot_idx], xsem.at[slot_idx])

    # ---- pipelined halo DMA + one-shot weight load ------------------------
    # Prime slot 0 and load the single-buffered weights at the first L-tile of
    # every batch row (re-issued per row so this stays correct if the batch
    # axis is megacore-sharded; the reload cost amortizes over NUM_L tiles).
    @pl.when(l == 0)
    def _():
        xdma(n, l, 0).start()
        pltpu.make_async_copy(w1_hbm, w1_vmem, wsem.at[0]).start()
        pltpu.make_async_copy(w2_hbm, w2_vmem, wsem.at[1]).start()
        pltpu.make_async_copy(w1_hbm, w1_vmem, wsem.at[0]).wait()
        pltpu.make_async_copy(w2_hbm, w2_vmem, wsem.at[1]).wait()

    slot = l % 2

    @pl.when(l + 1 < NUM_L)                 # prefetch next tile's window
    def _():
        xdma(n, l + 1, (l + 1) % 2).start()

    xdma(n, l, slot).wait()                 # current window ready

    # ---- elementwise on the window (bf16 on v6e/v7x, f32 on v5e) ----------
    x_act = _lrelu(xbuf[slot].astype(ew_dtype))   # zero pads stay zero
    x_mx = x_act.astype(compute_dtype)            # MXU operand

    # columns of the intermediate h inside the true signal range [0, L_real):
    # reproduces padding='same' zero-padding of the second conv at the edges.
    g0 = l * L_TILE
    col = lax.broadcasted_iota(jnp.int32, (1, L1), 1)
    gcol = g0 + col - pad_l2
    valid = (gcol >= 0) & (gcol < L_real)

    # accumulator initialised with the hoisted sum of the conv2 biases
    acc_ref[...] = jnp.broadcast_to(b2s_ref[...], acc_ref.shape)

    for i, d in enumerate(dilations):       # static unroll over dilation blocks
        pad_l1 = d * (K - 1) // 2
        base = HL - pad_l2 - pad_l1
        # conv1 (dilation d): per-tap MXU contractions, f32 accumulation
        h = None
        for t in range(K):
            xs = x_mx[:, base + t * d: base + t * d + L1]
            p = jnp.dot(w1_vmem[i * K + t], xs,
                        preferred_element_type=jnp.float32)
            h = p if h is None else h + p
        h = _lrelu(h.astype(ew_dtype) + b1_ref[i])   # bias + LeakyReLU
        h = jnp.where(valid, h, 0)                    # 'same' zero-pad of h
        h_mx = h.astype(compute_dtype)
        # conv2 (dilation 1): per-tap contractions accumulated into acc_ref
        for t in range(K):
            acc_ref[...] += jnp.dot(w2_vmem[i * K + t], h_mx[:, t: t + L_TILE],
                                    preferred_element_type=jnp.float32)

    # NOTE: columns >= L_real carry bias garbage; the wrapper's final
    # out[:, :C, :L] slice is load-bearing.
    o_ref[0] = acc_ref[...].astype(o_ref.dtype)


# ---------------------------------------------------------------------------
# Wrapper: padding, tap-major weight layout, tiling, pallas_call
# ---------------------------------------------------------------------------
def resblock_forward(x, params, dilations, *, kernel_size, l_tile=1024,
                     compute_dtype=jnp.bfloat16, elementwise_dtype=None,
                     vmem_limit_bytes=48 * 1024 * 1024):
    """Fused ResBlock forward.

    compute_dtype    : MXU-operand / HBM-activation dtype (bf16 recommended).
    elementwise_dtype: dtype of the LeakyReLU / bias / mask path. Default =
                       compute_dtype (right for v6e/v7x bf16 VALUs); pass
                       jnp.float32 on v5e (no bf16 VALU).
    l_tile           : output-tile length. 1024-2048 on v5e/v6e (128 MiB VMEM,
                       raise vmem_limit_bytes to ~96 MiB), 512-1024 on v7x
                       (64 MiB VMEM, keep the default budget).
    """
    N, C, L = x.shape
    K = kernel_size
    nblocks = len(dilations)
    ew_dtype = compute_dtype if elementwise_dtype is None else elementwise_dtype

    # 'same' halos: conv1 (worst dilation) + conv2 (dilation 1)
    pad_l2 = (K - 1) // 2
    pad_r2 = (K - 1) - pad_l2
    HL = max(d * (K - 1) // 2 for d in dilations) + pad_l2
    HR = max(d * (K - 1) - d * (K - 1) // 2 for d in dilations) + pad_r2

    # lane-dense output tiles (multiples of 128); single tile when L is small
    if L <= l_tile:
        L_TILE = _round_up(L, 128)
    else:
        assert l_tile % 128 == 0, "l_tile must be a multiple of 128"
        L_TILE = l_tile
    Lpad = _round_up(L, L_TILE)
    num_l = Lpad // L_TILE

    # channel padding to the storage dtype's sublane multiple (16 bf16 / 8 f32)
    c_mult = 8 * 4 // jnp.dtype(compute_dtype).itemsize
    C_pad = _round_up(C, c_mult)
    # TODO(synk): for tiny C (< 128) fold the batch / several L-tiles into the
    # matmul M/N dims; at C this small the MXU runs nearly empty.

    # halo'd window, padded to a lane-dense (multiple-of-128) DMA extent
    Wwin = HL + L_TILE + HR
    Wpad = _round_up(Wwin, 128)
    Xlen = (num_l - 1) * L_TILE + Wpad      # every tile window stays in bounds
    xp = jnp.pad(x, ((0, 0), (0, C_pad - C), (HL, Xlen - L - HL)))
    xp = xp.astype(compute_dtype)           # bf16 through HBM by default

    # weights: pad channels, reorder tap-major -> (nblocks*K, C_out, C_in)
    def prep_w(w):
        w = jnp.pad(w, ((0, C_pad - C), (0, C_pad - C), (0, 0)))
        return jnp.transpose(w, (2, 0, 1)).astype(compute_dtype)  # (K, Co, Ci)

    w1s, w2s, b1s, b2s = [], [], [], []
    for (w1, b1), (w2, b2) in params:
        w1s.append(prep_w(w1))
        w2s.append(prep_w(w2))
        b1s.append(jnp.pad(b1, (0, C_pad - C)).reshape(C_pad, 1))
        b2s.append(jnp.pad(b2, (0, C_pad - C)).reshape(C_pad, 1))
    w1a = jnp.concatenate(w1s, axis=0)                       # (nblocks*K, C, C)
    w2a = jnp.concatenate(w2s, axis=0)
    b1a = jnp.stack(b1s).astype(ew_dtype)                    # (nblocks, C, 1)
    b2sum = jnp.sum(jnp.stack(b2s), axis=0).astype(jnp.float32)   # (C, 1)

    kern = functools.partial(
        _resblock_kernel, dilations=tuple(dilations), K=K, L_real=L,
        L_TILE=L_TILE, NUM_L=num_l, HL=HL, Wpad=Wpad,
        compute_dtype=compute_dtype, ew_dtype=ew_dtype)

    # advisory cost estimate for XLA scheduling around the custom call
    L1 = L_TILE + K - 1
    flops = 2 * N * num_l * nblocks * K * C_pad * C_pad * (L1 + L_TILE)
    bytes_accessed = (
        N * num_l * (C_pad * Wpad * jnp.dtype(compute_dtype).itemsize
                     + C_pad * L_TILE * jnp.dtype(x.dtype).itemsize)
        + 2 * nblocks * K * C_pad * C_pad * jnp.dtype(compute_dtype).itemsize)
    cost = pl.CostEstimate(flops=flops, transcendentals=0,
                           bytes_accessed=bytes_accessed)

    out = pl.pallas_call(
        kern,
        out_shape=jax.ShapeDtypeStruct((N, C_pad, Lpad), x.dtype),
        grid_spec=pltpu.PrefetchScalarGridSpec(
            num_scalar_prefetch=0,
            grid=(N, num_l),
            in_specs=[
                pl.BlockSpec(memory_space=pl.ANY),                       # x
                pl.BlockSpec(memory_space=pl.ANY),                       # w1
                pl.BlockSpec(memory_space=pl.ANY),                       # w2
                pl.BlockSpec((nblocks, C_pad, 1), lambda n, l: (0, 0, 0)),  # b1
                pl.BlockSpec((C_pad, 1), lambda n, l: (0, 0)),           # sum b2
            ],
            out_specs=pl.BlockSpec((1, C_pad, L_TILE), lambda n, l: (n, 0, l)),
            scratch_shapes=[
                pltpu.VMEM((2, C_pad, Wpad), compute_dtype),             # xbuf
                pltpu.VMEM((nblocks * K, C_pad, C_pad), compute_dtype),  # w1
                pltpu.VMEM((nblocks * K, C_pad, C_pad), compute_dtype),  # w2
                pltpu.VMEM((C_pad, L_TILE), jnp.float32),                # acc
                pltpu.SemaphoreType.DMA((2,)),                           # x sems
                pltpu.SemaphoreType.DMA((2,)),                           # w sems
            ],
        ),
        compiler_params=pltpu.CompilerParams(
            # The L axis carries the cross-step halo-DMA prefetch, so it must
            # stay sequential ("arbitrary"); the batch axis may be megacore-split.
            dimension_semantics=("parallel", "arbitrary"),
            vmem_limit_bytes=vmem_limit_bytes,
        ),
        cost_estimate=cost,
    )(xp, w1a, w2a, b1a, b2sum)

    # load-bearing: strips channel padding and the bias-garbage tail >= L
    return out[:, :C, :L]


# ---------------------------------------------------------------------------
# weight_norm reparametrization + parameter init (plain-JAX glue)
# ---------------------------------------------------------------------------
def weight_norm_effective(v, g):
    # v: (C_out, C_in, K), g: (C_out, 1, 1)  (torch weight_norm, dim=0)
    norm = jnp.sqrt(jnp.sum(v * v, axis=(1, 2), keepdims=True))
    return g * v / norm


def init_resblock_params(key, channels, kernel_size, dilations):
    params = []
    for _ in dilations:
        convs = []
        for _conv in range(2):
            key, kv, kg, kb = jax.random.split(key, 4)
            v = 0.1 * jax.random.normal(
                kv, (channels, channels, kernel_size), jnp.float32)
            g = 1.0 + 0.01 * jax.random.normal(kg, (channels, 1, 1), jnp.float32)
            b = 0.1 * jax.random.normal(kb, (channels,), jnp.float32)
            convs.append((weight_norm_effective(v, g), b))
        params.append((convs[0], convs[1]))
    return params


# ---------------------------------------------------------------------------
# Pure-JAX reference (correctness check)
# ---------------------------------------------------------------------------
def _ref_conv1d_same(x, w, b, dilation):
    K = w.shape[-1]
    total = dilation * (K - 1)
    p_l, p_r = total // 2, total - total // 2
    y = lax.conv_general_dilated(
        x, w, window_strides=(1,), padding=[(p_l, p_r)],
        rhs_dilation=(dilation,), dimension_numbers=("NCH", "OIH", "NCH"),
        precision=lax.Precision.HIGHEST)
    return y + b[None, :, None]


def resblock_reference(x, params, dilations):
    out = jnp.zeros_like(x)
    for ((w1, b1), (w2, b2)), d in zip(params, dilations):
        h = _ref_conv1d_same(_lrelu(x), w1, b1, d)
        h = _ref_conv1d_same(_lrelu(h), w2, b2, 1)
        out = out + h
    return out


def _run_check(key, N, C, L, kernel_size, dilations, l_tile, check_v5e=False):
    key, kx, kp = jax.random.split(key, 3)
    x = jax.random.normal(kx, (N, C, L), jnp.float32)
    params = init_resblock_params(kp, C, kernel_size, dilations)

    # f32 path: validates fusion / halo-DMA pipelining / tiling / masking exactly.
    out32 = jax.block_until_ready(resblock_forward(
        x, params, dilations, kernel_size=kernel_size, l_tile=l_tile,
        compute_dtype=jnp.float32))
    ref32 = jax.block_until_ready(resblock_reference(x, params, dilations))
    assert out32.shape == (N, C, L)
    assert jnp.allclose(out32, ref32, rtol=1e-4, atol=1e-4), (
        f"f32 max abs diff {jnp.max(jnp.abs(out32 - ref32))}")

    # bf16 fast path (default: bf16 MXU operands + bf16 elementwise, f32 accum).
    out16 = jax.block_until_ready(resblock_forward(
        x, params, dilations, kernel_size=kernel_size, l_tile=l_tile,
        compute_dtype=jnp.bfloat16))
    x_r = x.astype(jnp.bfloat16).astype(jnp.float32)
    params_r = [((w1.astype(jnp.bfloat16).astype(jnp.float32), b1),
                 (w2.astype(jnp.bfloat16).astype(jnp.float32), b2))
                for (w1, b1), (w2, b2) in params]
    ref16 = jax.block_until_ready(resblock_reference(x_r, params_r, dilations))
    # activations AND elementwise run in bf16 in-kernel -> looser tolerance
    assert jnp.allclose(out16, ref16, rtol=5e-2, atol=1e-1), (
        f"bf16 max abs diff {jnp.max(jnp.abs(out16 - ref16))}")

    if check_v5e:
        # v5e-style config: bf16 MXU operands, f32 elementwise path.
        out_v5e = jax.block_until_ready(resblock_forward(
            x, params, dilations, kernel_size=kernel_size, l_tile=l_tile,
            compute_dtype=jnp.bfloat16, elementwise_dtype=jnp.float32))
        assert jnp.allclose(out_v5e, ref16, rtol=5e-2, atol=1e-1), (
            f"bf16/f32-ew max abs diff {jnp.max(jnp.abs(out_v5e - ref16))}")
    return key


if __name__ == "__main__":
    key = jax.random.PRNGKey(0)
    # Small, module-consistent shapes: Conv1d(4, 4, 3, dilation=d, padding='same').
    key = _run_check(key, N=2, C=4, L=16, kernel_size=3, dilations=(1, 3),
                     l_tile=512, check_v5e=True)
    # Larger shapes exercising L tiling + double-buffered halo DMA + tail
    # masking + channel padding (multi-tile code path).
    key = _run_check(key, N=2, C=12, L=300, kernel_size=3, dilations=(1, 3, 5),
                     l_tile=128)
    print("KERNEL_OK")
</pallas_src>

<mosaic_0001>
module attributes {stable_mosaic.version = 11 : i64} {
  func.func @_resblock_kernel(%arg0: i32, %arg1: i32, %arg2: memref<2x8x256xf32, #tpu.memory_space<any>>, %arg3: memref<6x8x8xf32, #tpu.memory_space<any>>, %arg4: memref<6x8x8xf32, #tpu.memory_space<any>>, %arg5: memref<2x8x1xf32, #tpu.memory_space<vmem>>, %arg6: memref<8x1xf32, #tpu.memory_space<vmem>>, %arg7: memref<1x8x128xf32, #tpu.memory_space<vmem>>, %arg8: memref<2x8x256xf32, #tpu.memory_space<vmem>>, %arg9: memref<6x8x8xf32, #tpu.memory_space<vmem>>, %arg10: memref<6x8x8xf32, #tpu.memory_space<vmem>>, %arg11: memref<8x128xf32, #tpu.memory_space<vmem>>, %arg12: memref<2x!tpu.dma_semaphore, #tpu.memory_space<semaphore_mem>>, %arg13: memref<2x!tpu.dma_semaphore, #tpu.memory_space<semaphore_mem>>) attributes {dimension_semantics = [#tpu.dimension_semantics<parallel>, #tpu.dimension_semantics<arbitrary>], iteration_bounds = array<i64: 2, 1>, scalar_prefetch = 0 : i64, scratch_operands = 6 : i64, tpu.core_type = #tpu.core_type<tc>, window_params = [{}, {}, {}, {pipeline_mode = #tpu.pipeline_mode<synchronous>, transform_indices = @transform_3, window_bounds = array<i64: 2, 8, 1>}, {pipeline_mode = #tpu.pipeline_mode<synchronous>, transform_indices = @transform_4, window_bounds = array<i64: 8, 1>}, {transform_indices = @transform_5, window_bounds = array<i64: 1, 8, 128>}]} {
    %c0_i32 = arith.constant 0 : i32
    %0 = arith.cmpi eq, %arg1, %c0_i32 : i32
    %1 = arith.extui %0 : i1 to i32
    %c0_i32_0 = arith.constant 0 : i32
    %2 = arith.cmpi ne, %1, %c0_i32_0 : i32
    scf.if %2 {
      %c128_i32_104 = arith.constant 128 : i32
      %150 = arith.muli %arg1, %c128_i32_104 : i32
      %151 = tpu.assume_multiple %150, 128 : i32
      %c0_i32_105 = arith.constant 0 : i32
      %c0_i32_106 = arith.constant 0 : i32
      %c0_i32_107 = arith.constant 0 : i32
      %152 = tpu.memref_slice %arg2[%arg0, %c0_i32_107, %151] : memref<2x8x256xf32, #tpu.memory_space<any>> -> memref<1x8x256xf32, #tpu.memory_space<any>>
      %153 = tpu.memref_squeeze %152 : memref<1x8x256xf32, #tpu.memory_space<any>> -> memref<8x256xf32, #tpu.memory_space<any>>
      %c0_i32_108 = arith.constant 0 : i32
      %c0_i32_109 = arith.constant 0 : i32
      %154 = tpu.memref_slice %arg8[%c0_i32_105, %c0_i32_108, %c0_i32_109] : memref<2x8x256xf32, #tpu.memory_space<vmem>> -> memref<1x8x256xf32, #tpu.memory_space<vmem>>
      %155 = tpu.memref_squeeze %154 : memref<1x8x256xf32, #tpu.memory_space<vmem>> -> memref<8x256xf32, #tpu.memory_space<vmem>>
      %156 = tpu.memref_slice %arg12[%c0_i32_106] : memref<2x!tpu.dma_semaphore, #tpu.memory_space<semaphore_mem>> -> memref<1x!tpu.dma_semaphore, #tpu.memory_space<semaphore_mem>>
      %157 = tpu.memref_squeeze %156 : memref<1x!tpu.dma_semaphore, #tpu.memory_space<semaphore_mem>> -> memref<!tpu.dma_semaphore, #tpu.memory_space<semaphore_mem>>
      tpu.enqueue_dma source(%153 : memref<8x256xf32, #tpu.memory_space<any>>) target(%155 : memref<8x256xf32, #tpu.memory_space<vmem>>) target_semaphore(%157 : memref<!tpu.dma_semaphore, #tpu.memory_space<semaphore_mem>>)
      %c0_i32_110 = arith.constant 0 : i32
      %158 = tpu.memref_slice %arg13[%c0_i32_110] : memref<2x!tpu.dma_semaphore, #tpu.memory_space<semaphore_mem>> -> memref<1x!tpu.dma_semaphore, #tpu.memory_space<semaphore_mem>>
      %159 = tpu.memref_squeeze %158 : memref<1x!tpu.dma_semaphore, #tpu.memory_space<semaphore_mem>> -> memref<!tpu.dma_semaphore, #tpu.memory_space<semaphore_mem>>
      tpu.enqueue_dma source(%arg3 : memref<6x8x8xf32, #tpu.memory_space<any>>) target(%arg9 : memref<6x8x8xf32, #tpu.memory_space<vmem>>) target_semaphore(%159 : memref<!tpu.dma_semaphore, #tpu.memory_space<semaphore_mem>>)
      %c1_i32_111 = arith.constant 1 : i32
      %160 = tpu.memref_slice %arg13[%c1_i32_111] : memref<2x!tpu.dma_semaphore, #tpu.memory_space<semaphore_mem>> -> memref<1x!tpu.dma_semaphore, #tpu.memory_space<semaphore_mem>>
      %161 = tpu.memref_squeeze %160 : memref<1x!tpu.dma_semaphore, #tpu.memory_space<semaphore_mem>> -> memref<!tpu.dma_semaphore, #tpu.memory_space<semaphore_mem>>
      tpu.enqueue_dma source(%arg4 : memref<6x8x8xf32, #tpu.memory_space<any>>) target(%arg10 : memref<6x8x8xf32, #tpu.memory_space<vmem>>) target_semaphore(%161 : memref<!tpu.dma_semaphore, #tpu.memory_space<semaphore_mem>>)
      %c0_i32_112 = arith.constant 0 : i32
      %162 = tpu.memref_slice %arg13[%c0_i32_112] : memref<2x!tpu.dma_semaphore, #tpu.memory_space<semaphore_mem>> -> memref<1x!tpu.dma_semaphore, #tpu.memory_space<semaphore_mem>>
      %163 = tpu.memref_squeeze %162 : memref<1x!tpu.dma_semaphore, #tpu.memory_space<semaphore_mem>> -> memref<!tpu.dma_semaphore, #tpu.memory_space<semaphore_mem>>
      tpu.wait_dma2 semaphore(%163 : memref<!tpu.dma_semaphore, #tpu.memory_space<semaphore_mem>>) src(%arg3 : memref<6x8x8xf32, #tpu.memory_space<any>>) dst(%arg9 : memref<6x8x8xf32, #tpu.memory_space<vmem>>)
      %c1_i32_113 = arith.constant 1 : i32
      %164 = tpu.memref_slice %arg13[%c1_i32_113] : memref<2x!tpu.dma_semaphore, #tpu.memory_space<semaphore_mem>> -> memref<1x!tpu.dma_semaphore, #tpu.memory_space<semaphore_mem>>
      %165 = tpu.memref_squeeze %164 : memref<1x!tpu.dma_semaphore, #tpu.memory_space<semaphore_mem>> -> memref<!tpu.dma_semaphore, #tpu.memory_space<semaphore_mem>>
      tpu.wait_dma2 semaphore(%165 : memref<!tpu.dma_semaphore, #tpu.memory_space<semaphore_mem>>) src(%arg4 : memref<6x8x8xf32, #tpu.memory_space<any>>) dst(%arg10 : memref<6x8x8xf32, #tpu.memory_space<vmem>>)
    } else {
    }
    %c2_i32 = arith.constant 2 : i32
    %c0_i32_1 = arith.constant 0 : i32
    %3 = arith.cmpi eq, %c2_i32, %c0_i32_1 : i32
    %c1_i32 = arith.constant 1 : i32
    %4 = arith.select %3, %c1_i32, %c2_i32 : i32
    %5 = arith.remsi %arg1, %4 : i32
    %c0_i32_2 = arith.constant 0 : i32
    %6 = arith.cmpi ne, %5, %c0_i32_2 : i32
    %c0_i32_3 = arith.constant 0 : i32
    %7 = arith.cmpi slt, %5, %c0_i32_3 : i32
    %c0_i32_4 = arith.constant 0 : i32
    %8 = arith.cmpi slt, %4, %c0_i32_4 : i32
    %9 = arith.xori %7, %8 : i1
    %10 = arith.andi %9, %6 : i1
    %11 = arith.addi %5, %4 : i32
    %12 = arith.select %10, %11, %5 : i32
    %c1_i32_5 = arith.constant 1 : i32
    %13 = arith.addi %arg1, %c1_i32_5 : i32
    %c1_i32_6 = arith.constant 1 : i32
    %14 = arith.cmpi slt, %13, %c1_i32_6 : i32
    %15 = arith.extui %14 : i1 to i32
    %c0_i32_7 = arith.constant 0 : i32
    %16 = arith.cmpi ne, %15, %c0_i32_7 : i32
    scf.if %16 {
      %c1_i32_104 = arith.constant 1 : i32
      %150 = arith.addi %arg1, %c1_i32_104 : i32
      %c1_i32_105 = arith.constant 1 : i32
      %151 = arith.addi %arg1, %c1_i32_105 : i32
      %c2_i32_106 = arith.constant 2 : i32
      %c0_i32_107 = arith.constant 0 : i32
      %152 = arith.cmpi eq, %c2_i32_106, %c0_i32_107 : i32
      %c1_i32_108 = arith.constant 1 : i32
      %153 = arith.select %152, %c1_i32_108, %c2_i32_106 : i32
      %154 = arith.remsi %151, %153 : i32
      %c0_i32_109 = arith.constant 0 : i32
      %155 = arith.cmpi ne, %154, %c0_i32_109 : i32
      %c0_i32_110 = arith.constant 0 : i32
      %156 = arith.cmpi slt, %154, %c0_i32_110 : i32
      %c0_i32_111 = arith.constant 0 : i32
      %157 = arith.cmpi slt, %153, %c0_i32_111 : i32
      %158 = arith.xori %156, %157 : i1
      %159 = arith.andi %158, %155 : i1
      %160 = arith.addi %154, %153 : i32
      %161 = arith.select %159, %160, %154 : i32
      %c128_i32_112 = arith.constant 128 : i32
      %162 = arith.muli %150, %c128_i32_112 : i32
      %163 = tpu.assume_multiple %162, 128 : i32
      %c0_i32_113 = arith.constant 0 : i32
      %164 = tpu.memref_slice %arg2[%arg0, %c0_i32_113, %163] : memref<2x8x256xf32, #tpu.memory_space<any>> -> memref<1x8x256xf32, #tpu.memory_space<any>>
      %165 = tpu.memref_squeeze %164 : memref<1x8x256xf32, #tpu.memory_space<any>> -> memref<8x256xf32, #tpu.memory_space<any>>
      %c0_i32_114 = arith.constant 0 : i32
      %c0_i32_115 = arith.constant 0 : i32
      %166 = tpu.memref_slice %arg8[%161, %c0_i32_114, %c0_i32_115] : memref<2x8x256xf32, #tpu.memory_space<vmem>> -> memref<1x8x256xf32, #tpu.memory_space<vmem>>
      %167 = tpu.memref_squeeze %166 : memref<1x8x256xf32, #tpu.memory_space<vmem>> -> memref<8x256xf32, #tpu.memory_space<vmem>>
      %168 = tpu.memref_slice %arg12[%161] : memref<2x!tpu.dma_semaphore, #tpu.memory_space<semaphore_mem>> -> memref<1x!tpu.dma_semaphore, #tpu.memory_space<semaphore_mem>>
      %169 = tpu.memref_squeeze %168 : memref<1x!tpu.dma_semaphore, #tpu.memory_space<semaphore_mem>> -> memref<!tpu.dma_semaphore, #tpu.memory_space<semaphore_mem>>
      tpu.enqueue_dma source(%165 : memref<8x256xf32, #tpu.memory_space<any>>) target(%167 : memref<8x256xf32, #tpu.memory_space<vmem>>) target_semaphore(%169 : memref<!tpu.dma_semaphore, #tpu.memory_space<semaphore_mem>>)
    } else {
    }
    %c128_i32 = arith.constant 128 : i32
    %17 = arith.muli %arg1, %c128_i32 : i32
    %18 = tpu.assume_multiple %17, 128 : i32
    %c0_i32_8 = arith.constant 0 : i32
    %19 = tpu.memref_slice %arg2[%arg0, %c0_i32_8, %18] : memref<2x8x256xf32, #tpu.memory_space<any>> -> memref<1x8x256xf32, #tpu.memory_space<any>>
    %20 = tpu.memref_squeeze %19 : memref<1x8x256xf32, #tpu.memory_space<any>> -> memref<8x256xf32, #tpu.memory_space<any>>
    %c0_i32_9 = arith.constant 0 : i32
    %c0_i32_10 = arith.constant 0 : i32
    %21 = tpu.memref_slice %arg8[%12, %c0_i32_9, %c0_i32_10] : memref<2x8x256xf32, #tpu.memory_space<vmem>> -> memref<1x8x256xf32, #tpu.memory_space<vmem>>
    %22 = tpu.memref_squeeze %21 : memref<1x8x256xf32, #tpu.memory_space<vmem>> -> memref<8x256xf32, #tpu.memory_space<vmem>>
    %23 = tpu.memref_slice %arg12[%12] : memref<2x!tpu.dma_semaphore, #tpu.memory_space<semaphore_mem>> -> memref<1x!tpu.dma_semaphore, #tpu.memory_space<semaphore_mem>>
    %24 = tpu.memref_squeeze %23 : memref<1x!tpu.dma_semaphore, #tpu.memory_space<semaphore_mem>> -> memref<!tpu.dma_semaphore, #tpu.memory_space<semaphore_mem>>
    tpu.wait_dma2 semaphore(%24 : memref<!tpu.dma_semaphore, #tpu.memory_space<semaphore_mem>>) src(%20 : memref<8x256xf32, #tpu.memory_space<any>>) dst(%22 : memref<8x256xf32, #tpu.memory_space<vmem>>)
    %25 = arith.index_cast %12 : i32 to index
    %c0 = arith.constant 0 : index
    %c0_11 = arith.constant 0 : index
    %26 = vector.load %arg8[%25, %c0, %c0_11] : memref<2x8x256xf32, #tpu.memory_space<vmem>>, vector<1x8x256xf32>
    %27 = vector.shape_cast %26 : vector<1x8x256xf32> to vector<8x256xf32>
    %cst = arith.constant 0.000000e+00 : f32
    %28 = vector.broadcast %cst : f32 to vector<8x256xf32>
    %29 = arith.cmpf ogt, %27, %28 : vector<8x256xf32>
    %cst_12 = arith.constant 0.00999999977 : f32
    %30 = vector.broadcast %cst_12 : f32 to vector<8x256xf32>
    %31 = arith.mulf %30, %27 : vector<8x256xf32>
    %32 = arith.select %29, %27, %31 : vector<8x256xi1>, vector<8x256xf32>
    %c128_i32_13 = arith.constant 128 : i32
    %33 = arith.muli %arg1, %c128_i32_13 : i32
    %34 = tpu.iota {dimensions = array<i32: 1>} : vector<1x130xi32>
    %35 = vector.broadcast %33 : i32 to vector<1x130xi32>
    %36 = arith.addi %35, %34 : vector<1x130xi32>
    %c1_i32_14 = arith.constant 1 : i32
    %37 = vector.broadcast %c1_i32_14 : i32 to vector<1x130xi32>
    %38 = arith.subi %36, %37 : vector<1x130xi32>
    %c0_i32_15 = arith.constant 0 : i32
    %39 = vector.broadcast %c0_i32_15 : i32 to vector<1x130xi32>
    %40 = arith.cmpi sge, %38, %39 : vector<1x130xi32>
    %c16_i32 = arith.constant 16 : i32
    %41 = vector.broadcast %c16_i32 : i32 to vector<1x130xi32>
    %42 = arith.cmpi slt, %38, %41 : vector<1x130xi32>
    %43 = arith.andi %40, %42 : vector<1x130xi1>
    %c0_16 = arith.constant 0 : index
    %c0_17 = arith.constant 0 : index
    %44 = vector.load %arg6[%c0_16, %c0_17] : memref<8x1xf32, #tpu.memory_space<vmem>>, vector<8x1xf32>
    %45 = vector.shape_cast %44 : vector<8x1xf32> to vector<8x1xf32>
    %46 = vector.broadcast %45 : vector<8x1xf32> to vector<8x128xf32>
    %c0_18 = arith.constant 0 : index
    %c0_19 = arith.constant 0 : index
    %47 = vector.load %arg11[%c0_18, %c0_19] : memref<8x128xf32, #tpu.memory_space<vmem>>, vector<8x128xf32>
    tpu.vector_store %arg11[%c0_18, %c0_19], %46 {strides = array<i32>} : memref<8x128xf32, #tpu.memory_space<vmem>>, vector<8x128xf32>,
    %48 = vector.extract_strided_slice %32 {offsets = [0, 2], sizes = [8, 130], strides = [1, 1]} : vector<8x256xf32> to vector<8x130xf32>
    %c0_20 = arith.constant 0 : index
    %c0_21 = arith.constant 0 : index
    %c0_22 = arith.constant 0 : index
    %49 = vector.load %arg9[%c0_20, %c0_21, %c0_22] : memref<6x8x8xf32, #tpu.memory_space<vmem>>, vector<1x8x8xf32>
    %50 = vector.shape_cast %49 : vector<1x8x8xf32> to vector<8x8xf32>
    %cst_23 = arith.constant dense<0.000000e+00> : vector<8x130xf32>
    %51 = tpu.matmul %50, %48, %cst_23 {dimension_numbers = #tpu.dot_dimension_numbers<[1], [0], [0], [1], [0, 0, 1, 1], [], []>} : vector<8x8xf32>, vector<8x130xf32>, vector<8x130xf32> -> vector<8x130xf32>
    %52 = vector.extract_strided_slice %32 {offsets = [0, 3], sizes = [8, 130], strides = [1, 1]} : vector<8x256xf32> to vector<8x130xf32>
    %c1 = arith.constant 1 : index
    %c0_24 = arith.constant 0 : index
    %c0_25 = arith.constant 0 : index
    %53 = vector.load %arg9[%c1, %c0_24, %c0_25] : memref<6x8x8xf32, #tpu.memory_space<vmem>>, vector<1x8x8xf32>
    %54 = vector.shape_cast %53 : vector<1x8x8xf32> to vector<8x8xf32>
    %cst_26 = arith.constant dense<0.000000e+00> : vector<8x130xf32>
    %55 = tpu.matmul %54, %52, %cst_26 {dimension_numbers = #tpu.dot_dimension_numbers<[1], [0], [0], [1], [0, 0, 1, 1], [], []>} : vector<8x8xf32>, vector<8x130xf32>, vector<8x130xf32> -> vector<8x130xf32>
    %56 = arith.addf %51, %55 : vector<8x130xf32>
    %57 = vector.extract_strided_slice %32 {offsets = [0, 4], sizes = [8, 130], strides = [1, 1]} : vector<8x256xf32> to vector<8x130xf32>
    %c2 = arith.constant 2 : index
    %c0_27 = arith.constant 0 : index
    %c0_28 = arith.constant 0 : index
    %58 = vector.load %arg9[%c2, %c0_27, %c0_28] : memref<6x8x8xf32, #tpu.memory_space<vmem>>, vector<1x8x8xf32>
    %59 = vector.shape_cast %58 : vector<1x8x8xf32> to vector<8x8xf32>
    %cst_29 = arith.constant dense<0.000000e+00> : vector<8x130xf32>
    %60 = tpu.matmul %59, %57, %cst_29 {dimension_numbers = #tpu.dot_dimension_numbers<[1], [0], [0], [1], [0, 0, 1, 1], [], []>} : vector<8x8xf32>, vector<8x130xf32>, vector<8x130xf32> -> vector<8x130xf32>
    %61 = arith.addf %56, %60 : vector<8x130xf32>
    %c0_30 = arith.constant 0 : index
    %c0_31 = arith.constant 0 : index
    %c0_32 = arith.constant 0 : index
    %62 = vector.load %arg5[%c0_30, %c0_31, %c0_32] : memref<2x8x1xf32, #tpu.memory_space<vmem>>, vector<1x8x1xf32>
    %63 = vector.shape_cast %62 : vector<1x8x1xf32> to vector<8x1xf32>
    %64 = vector.broadcast %63 : vector<8x1xf32> to vector<8x130xf32>
    %65 = arith.addf %61, %64 : vector<8x130xf32>
    %cst_33 = arith.constant 0.000000e+00 : f32
    %66 = vector.broadcast %cst_33 : f32 to vector<8x130xf32>
    %67 = arith.cmpf ogt, %65, %66 : vector<8x130xf32>
    %cst_34 = arith.constant 0.00999999977 : f32
    %68 = vector.broadcast %cst_34 : f32 to vector<8x130xf32>
    %69 = arith.mulf %68, %65 : vector<8x130xf32>
    %70 = arith.select %67, %65, %69 : vector<8x130xi1>, vector<8x130xf32>
    %c0_i32_35 = arith.constant 0 : i32
    %71 = arith.sitofp %c0_i32_35 : i32 to f32
    %72 = vector.shape_cast %43 : vector<1x130xi1> to vector<1x130xi1>
    %73 = vector.broadcast %72 : vector<1x130xi1> to vector<8x130xi1>
    %74 = vector.broadcast %71 : f32 to vector<8x130xf32>
    %75 = arith.select %73, %70, %74 : vector<8x130xi1>, vector<8x130xf32>
    %c0_36 = arith.constant 0 : index
    %c0_37 = arith.constant 0 : index
    %76 = vector.load %arg11[%c0_36, %c0_37] : memref<8x128xf32, #tpu.memory_space<vmem>>, vector<8x128xf32>
    %c0_38 = arith.constant 0 : index
    %c0_39 = arith.constant 0 : index
    %c0_40 = arith.constant 0 : index
    %77 = vector.load %arg10[%c0_38, %c0_39, %c0_40] : memref<6x8x8xf32, #tpu.memory_space<vmem>>, vector<1x8x8xf32>
    %78 = vector.shape_cast %77 : vector<1x8x8xf32> to vector<8x8xf32>
    %79 = vector.extract_strided_slice %75 {offsets = [0, 0], sizes = [8, 128], strides = [1, 1]} : vector<8x130xf32> to vector<8x128xf32>
    %cst_41 = arith.constant dense<0.000000e+00> : vector<8x128xf32>
    %80 = tpu.matmul %78, %79, %cst_41 {dimension_numbers = #tpu.dot_dimension_numbers<[1], [0], [0], [1], [0, 0, 1, 1], [], []>} : vector<8x8xf32>, vector<8x128xf32>, vector<8x128xf32> -> vector<8x128xf32>
    %81 = arith.addf %76, %80 : vector<8x128xf32>
    %c0_42 = arith.constant 0 : index
    %c0_43 = arith.constant 0 : index
    %82 = vector.load %arg11[%c0_42, %c0_43] : memref<8x128xf32, #tpu.memory_space<vmem>>, vector<8x128xf32>
    tpu.vector_store %arg11[%c0_42, %c0_43], %81 {strides = array<i32>} : memref<8x128xf32, #tpu.memory_space<vmem>>, vector<8x128xf32>,
    %c0_44 = arith.constant 0 : index
    %c0_45 = arith.constant 0 : index
    %83 = vector.load %arg11[%c0_44, %c0_45] : memref<8x128xf32, #tpu.memory_space<vmem>>, vector<8x128xf32>
    %c1_46 = arith.constant 1 : index
    %c0_47 = arith.constant 0 : index
    %c0_48 = arith.constant 0 : index
    %84 = vector.load %arg10[%c1_46, %c0_47, %c0_48] : memref<6x8x8xf32, #tpu.memory_space<vmem>>, vector<1x8x8xf32>
    %85 = vector.shape_cast %84 : vector<1x8x8xf32> to vector<8x8xf32>
    %86 = vector.extract_strided_slice %75 {offsets = [0, 1], sizes = [8, 128], strides = [1, 1]} : vector<8x130xf32> to vector<8x128xf32>
    %cst_49 = arith.constant dense<0.000000e+00> : vector<8x128xf32>
    %87 = tpu.matmul %85, %86, %cst_49 {dimension_numbers = #tpu.dot_dimension_numbers<[1], [0], [0], [1], [0, 0, 1, 1], [], []>} : vector<8x8xf32>, vector<8x128xf32>, vector<8x128xf32> -> vector<8x128xf32>
    %88 = arith.addf %83, %87 : vector<8x128xf32>
    %c0_50 = arith.constant 0 : index
    %c0_51 = arith.constant 0 : index
    %89 = vector.load %arg11[%c0_50, %c0_51] : memref<8x128xf32, #tpu.memory_space<vmem>>, vector<8x128xf32>
    tpu.vector_store %arg11[%c0_50, %c0_51], %88 {strides = array<i32>} : memref<8x128xf32, #tpu.memory_space<vmem>>, vector<8x128xf32>,
    %c0_52 = arith.constant 0 : index
    %c0_53 = arith.constant 0 : index
    %90 = vector.load %arg11[%c0_52, %c0_53] : memref<8x128xf32, #tpu.memory_space<vmem>>, vector<8x128xf32>
    %c2_54 = arith.constant 2 : index
    %c0_55 = arith.constant 0 : index
    %c0_56 = arith.constant 0 : index
    %91 = vector.load %arg10[%c2_54, %c0_55, %c0_56] : memref<6x8x8xf32, #tpu.memory_space<vmem>>, vector<1x8x8xf32>
    %92 = vector.shape_cast %91 : vector<1x8x8xf32> to vector<8x8xf32>
    %93 = vector.extract_strided_slice %75 {offsets = [0, 2], sizes = [8, 128], strides = [1, 1]} : vector<8x130xf32> to vector<8x128xf32>
    %cst_57 = arith.constant dense<0.000000e+00> : vector<8x128xf32>
    %94 = tpu.matmul %92, %93, %cst_57 {dimension_numbers = #tpu.dot_dimension_numbers<[1], [0], [0], [1], [0, 0, 1, 1], [], []>} : vector<8x8xf32>, vector<8x128xf32>, vector<8x128xf32> -> vector<8x128xf32>
    %95 = arith.addf %90, %94 : vector<8x128xf32>
    %c0_58 = arith.constant 0 : index
    %c0_59 = arith.constant 0 : index
    %96 = vector.load %arg11[%c0_58, %c0_59] : memref<8x128xf32, #tpu.memory_space<vmem>>, vector<8x128xf32>
    tpu.vector_store %arg11[%c0_58, %c0_59], %95 {strides = array<i32>} : memref<8x128xf32, #tpu.memory_space<vmem>>, vector<8x128xf32>,
    %97 = vector.extract_strided_slice %32 {offsets = [0, 0], sizes = [8, 130], strides = [1, 1]} : vector<8x256xf32> to vector<8x130xf32>
    %c3 = arith.constant 3 : index
    %c0_60 = arith.constant 0 : index
    %c0_61 = arith.constant 0 : index
    %98 = vector.load %arg9[%c3, %c0_60, %c0_61] : memref<6x8x8xf32, #tpu.memory_space<vmem>>, vector<1x8x8xf32>
    %99 = vector.shape_cast %98 : vector<1x8x8xf32> to vector<8x8xf32>
    %cst_62 = arith.constant dense<0.000000e+00> : vector<8x130xf32>
    %100 = tpu.matmul %99, %97, %cst_62 {dimension_numbers = #tpu.dot_dimension_numbers<[1], [0], [0], [1], [0, 0, 1, 1], [], []>} : vector<8x8xf32>, vector<8x130xf32>, vector<8x130xf32> -> vector<8x130xf32>
    %101 = vector.extract_strided_slice %32 {offsets = [0, 3], sizes = [8, 130], strides = [1, 1]} : vector<8x256xf32> to vector<8x130xf32>
    %c4 = arith.constant 4 : index
    %c0_63 = arith.constant 0 : index
    %c0_64 = arith.constant 0 : index
    %102 = vector.load %arg9[%c4, %c0_63, %c0_64] : memref<6x8x8xf32, #tpu.memory_space<vmem>>, vector<1x8x8xf32>
    %103 = vector.shape_cast %102 : vector<1x8x8xf32> to vector<8x8xf32>
    %cst_65 = arith.constant dense<0.000000e+00> : vector<8x130xf32>
    %104 = tpu.matmul %103, %101, %cst_65 {dimension_numbers = #tpu.dot_dimension_numbers<[1], [0], [0], [1], [0, 0, 1, 1], [], []>} : vector<8x8xf32>, vector<8x130xf32>, vector<8x130xf32> -> vector<8x130xf32>
    %105 = arith.addf %100, %104 : vector<8x130xf32>
    %106 = vector.extract_strided_slice %32 {offsets = [0, 6], sizes = [8, 130], strides = [1, 1]} : vector<8x256xf32> to vector<8x130xf32>
    %c5 = arith.constant 5 : index
    %c0_66 = arith.constant 0 : index
    %c0_67 = arith.constant 0 : index
    %107 = vector.load %arg9[%c5, %c0_66, %c0_67] : memref<6x8x8xf32, #tpu.memory_space<vmem>>, vector<1x8x8xf32>
    %108 = vector.shape_cast %107 : vector<1x8x8xf32> to vector<8x8xf32>
    %cst_68 = arith.constant dense<0.000000e+00> : vector<8x130xf32>
    %109 = tpu.matmul %108, %106, %cst_68 {dimension_numbers = #tpu.dot_dimension_numbers<[1], [0], [0], [1], [0, 0, 1, 1], [], []>} : vector<8x8xf32>, vector<8x130xf32>, vector<8x130xf32> -> vector<8x130xf32>
    %110 = arith.addf %105, %109 : vector<8x130xf32>
    %c1_69 = arith.constant 1 : index
    %c0_70 = arith.constant 0 : index
    %c0_71 = arith.constant 0 : index
    %111 = vector.load %arg5[%c1_69, %c0_70, %c0_71] : memref<2x8x1xf32, #tpu.memory_space<vmem>>, vector<1x8x1xf32>
    %112 = vector.shape_cast %111 : vector<1x8x1xf32> to vector<8x1xf32>
    %113 = vector.broadcast %112 : vector<8x1xf32> to vector<8x130xf32>
    %114 = arith.addf %110, %113 : vector<8x130xf32>
    %cst_72 = arith.constant 0.000000e+00 : f32
    %115 = vector.broadcast %cst_72 : f32 to vector<8x130xf32>
    %116 = arith.cmpf ogt, %114, %115 : vector<8x130xf32>
    %cst_73 = arith.constant 0.00999999977 : f32
    %117 = vector.broadcast %cst_73 : f32 to vector<8x130xf32>
    %118 = arith.mulf %117, %114 : vector<8x130xf32>
    %119 = arith.select %116, %114, %118 : vector<8x130xi1>, vector<8x130xf32>
    %c0_i32_74 = arith.constant 0 : i32
    %120 = arith.sitofp %c0_i32_74 : i32 to f32
    %121 = vector.shape_cast %43 : vector<1x130xi1> to vector<1x130xi1>
    %122 = vector.broadcast %121 : vector<1x130xi1> to vector<8x130xi1>
    %123 = vector.broadcast %120 : f32 to vector<8x130xf32>
    %124 = arith.select %122, %119, %123 : vector<8x130xi1>, vector<8x130xf32>
    %c0_75 = arith.constant 0 : index
    %c0_76 = arith.constant 0 : index
    %125 = vector.load %arg11[%c0_75, %c0_76] : memref<8x128xf32, #tpu.memory_space<vmem>>, vector<8x128xf32>
    %c3_77 = arith.constant 3 : index
    %c0_78 = arith.constant 0 : index
    %c0_79 = arith.constant 0 : index
    %126 = vector.load %arg10[%c3_77, %c0_78, %c0_79] : memref<6x8x8xf32, #tpu.memory_space<vmem>>, vector<1x8x8xf32>
    %127 = vector.shape_cast %126 : vector<1x8x8xf32> to vector<8x8xf32>
    %128 = vector.extract_strided_slice %124 {offsets = [0, 0], sizes = [8, 128], strides = [1, 1]} : vector<8x130xf32> to vector<8x128xf32>
    %cst_80 = arith.constant dense<0.000000e+00> : vector<8x128xf32>
    %129 = tpu.matmul %127, %128, %cst_80 {dimension_numbers = #tpu.dot_dimension_numbers<[1], [0], [0], [1], [0, 0, 1, 1], [], []>} : vector<8x8xf32>, vector<8x128xf32>, vector<8x128xf32> -> vector<8x128xf32>
    %130 = arith.addf %125, %129 : vector<8x128xf32>
    %c0_81 = arith.constant 0 : index
    %c0_82 = arith.constant 0 : index
    %131 = vector.load %arg11[%c0_81, %c0_82] : memref<8x128xf32, #tpu.memory_space<vmem>>, vector<8x128xf32>
    tpu.vector_store %arg11[%c0_81, %c0_82], %130 {strides = array<i32>} : memref<8x128xf32, #tpu.memory_space<vmem>>, vector<8x128xf32>,
    %c0_83 = arith.constant 0 : index
    %c0_84 = arith.constant 0 : index
    %132 = vector.load %arg11[%c0_83, %c0_84] : memref<8x128xf32, #tpu.memory_space<vmem>>, vector<8x128xf32>
    %c4_85 = arith.constant 4 : index
    %c0_86 = arith.constant 0 : index
    %c0_87 = arith.constant 0 : index
    %133 = vector.load %arg10[%c4_85, %c0_86, %c0_87] : memref<6x8x8xf32, #tpu.memory_space<vmem>>, vector<1x8x8xf32>
    %134 = vector.shape_cast %133 : vector<1x8x8xf32> to vector<8x8xf32>
    %135 = vector.extract_strided_slice %124 {offsets = [0, 1], sizes = [8, 128], strides = [1, 1]} : vector<8x130xf32> to vector<8x128xf32>
    %cst_88 = arith.constant dense<0.000000e+00> : vector<8x128xf32>
    %136 = tpu.matmul %134, %135, %cst_88 {dimension_numbers = #tpu.dot_dimension_numbers<[1], [0], [0], [1], [0, 0, 1, 1], [], []>} : vector<8x8xf32>, vector<8x128xf32>, vector<8x128xf32> -> vector<8x128xf32>
    %137 = arith.addf %132, %136 : vector<8x128xf32>
    %c0_89 = arith.constant 0 : index
    %c0_90 = arith.constant 0 : index
    %138 = vector.load %arg11[%c0_89, %c0_90] : memref<8x128xf32, #tpu.memory_space<vmem>>, vector<8x128xf32>
    tpu.vector_store %arg11[%c0_89, %c0_90], %137 {strides = array<i32>} : memref<8x128xf32, #tpu.memory_space<vmem>>, vector<8x128xf32>,
    %c0_91 = arith.constant 0 : index
    %c0_92 = arith.constant 0 : index
    %139 = vector.load %arg11[%c0_91, %c0_92] : memref<8x128xf32, #tpu.memory_space<vmem>>, vector<8x128xf32>
    %c5_93 = arith.constant 5 : index
    %c0_94 = arith.constant 0 : index
    %c0_95 = arith.constant 0 : index
    %140 = vector.load %arg10[%c5_93, %c0_94, %c0_95] : memref<6x8x8xf32, #tpu.memory_space<vmem>>, vector<1x8x8xf32>
    %141 = vector.shape_cast %140 : vector<1x8x8xf32> to vector<8x8xf32>
    %142 = vector.extract_strided_slice %124 {offsets = [0, 2], sizes = [8, 128], strides = [1, 1]} : vector<8x130xf32> to vector<8x128xf32>
    %cst_96 = arith.constant dense<0.000000e+00> : vector<8x128xf32>
    %143 = tpu.matmul %141, %142, %cst_96 {dimension_numbers = #tpu.dot_dimension_numbers<[1], [0], [0], [1], [0, 0, 1, 1], [], []>} : vector<8x8xf32>, vector<8x128xf32>, vector<8x128xf32> -> vector<8x128xf32>
    %144 = arith.addf %139, %143 : vector<8x128xf32>
    %c0_97 = arith.constant 0 : index
    %c0_98 = arith.constant 0 : index
    %145 = vector.load %arg11[%c0_97, %c0_98] : memref<8x128xf32, #tpu.memory_space<vmem>>, vector<8x128xf32>
    tpu.vector_store %arg11[%c0_97, %c0_98], %144 {strides = array<i32>} : memref<8x128xf32, #tpu.memory_space<vmem>>, vector<8x128xf32>,
    %c0_99 = arith.constant 0 : index
    %c0_100 = arith.constant 0 : index
    %146 = vector.load %arg11[%c0_99, %c0_100] : memref<8x128xf32, #tpu.memory_space<vmem>>, vector<8x128xf32>
    %c0_101 = arith.constant 0 : index
    %c0_102 = arith.constant 0 : index
    %c0_103 = arith.constant 0 : index
    %147 = vector.load %arg7[%c0_101, %c0_102, %c0_103] : memref<1x8x128xf32, #tpu.memory_space<vmem>>, vector<1x8x128xf32>
    %148 = vector.shape_cast %147 : vector<1x8x128xf32> to vector<8x128xf32>
    %149 = vector.shape_cast %146 : vector<8x128xf32> to vector<1x8x128xf32>
    tpu.vector_store %arg7[%c0_101, %c0_102, %c0_103], %149 {strides = array<i32>} : memref<1x8x128xf32, #tpu.memory_space<vmem>>, vector<1x8x128xf32>,
    return
  }
  func.func @transform_3(%arg0: i32, %arg1: i32) -> (i32, i32, i32) {
    %c0_i32 = arith.constant 0 : i32
    %c0_i32_0 = arith.constant 0 : i32
    %c0_i32_1 = arith.constant 0 : i32
    %c0_i32_2 = arith.constant 0 : i32
    return %c0_i32, %c0_i32_0, %c0_i32_1 : i32, i32, i32
  }
  func.func @transform_4(%arg0: i32, %arg1: i32) -> (i32, i32) {
    %c0_i32 = arith.constant 0 : i32
    %c0_i32_0 = arith.constant 0 : i32
    %c0_i32_1 = arith.constant 0 : i32
    return %c0_i32, %c0_i32_0 : i32, i32
  }
  func.func @transform_5(%arg0: i32, %arg1: i32) -> (i32, i32, i32) {
    %c0_i32 = arith.constant 0 : i32
    %c0_i32_0 = arith.constant 0 : i32
    return %arg0, %c0_i32, %arg1 : i32, i32, i32
  }
}

</mosaic_0001>

<llo_original>
// kernel: tpu_custom_call.1
$region0: #{tpu_custom_call.1}
  #allocation0 [shape = 'u32[]', space=smem, size = 0x4, offset = 0x4, fixed_abs, tag = 'smem constant byte address 0x4 - core index']
  #allocation1 [shape = 'u32[72,128]{1,0:T(1,128)}', space=vmem, size = 0x9000, scoped, tag = 'internal scratch']
  #allocation2 [shape = 'f32[2,8,256]{2,1,0:T(8,128)}', space=vmem, size = 0x4000, scoped, tag = 'scratch operand']
  #allocation3 [shape = 'f32[6,8,8]{2,1,0:T(8,128)}', space=vmem, size = 0x6000, scoped, tag = 'scratch operand']
  #allocation4 [shape = 'f32[6,8,8]{2,1,0:T(8,128)}', space=vmem, size = 0x6000, scoped, tag = 'scratch operand']
  #allocation5 [shape = 'f32[8,128]{1,0:T(8,128)}', space=vmem, size = 0x1000, scoped, tag = 'scratch operand']
  #allocation6 [shape = 's32[2]{0}', space=sflag, size = 0x8, scoped, tag = 'scratch operand']
  #allocation7 [shape = 's32[2]{0}', space=sflag, size = 0x8, scoped, tag = 'scratch operand']
  #allocation10 [shape = 's32[]', space=sflag, size = 0x4, offset = 0, fixed_abs, tag = 'sflag constant byte address 0x0 - dummy sync flag']
  #allocation11 [shape = 's32[]', space=sflag, size = 0x4, offset = 0, fixed_abs, tag = 'sflag constant byte address 0x0 - dummy sync flag']
  #allocation12 [shape = 'u32[]', space=smem, size = 0x4, offset = 0x44, fixed_abs, tag = 'smem constant byte address 0x44 - assertion arg 0']
  #allocation13 [shape = 'u32[]', space=smem, size = 0x4, offset = 0x48, fixed_abs, tag = 'smem constant byte address 0x48 - assertion arg 1']
  #allocation14 [shape = 's32[]', space=sflag, size = 0x4, offset = 0, fixed_abs, tag = 'sflag constant byte address 0x0 - dummy sync flag']
  #allocation15 [shape = 's32[]', space=sflag, size = 0x4, offset = 0, fixed_abs, tag = 'sflag constant byte address 0x0 - dummy sync flag']
  #allocation16 [shape = 's32[]', space=sflag, size = 0x4, offset = 0, fixed_abs, tag = 'sflag constant byte address 0x0 - dummy sync flag']
  #allocation17 [shape = 's32[]', space=sflag, size = 0x4, offset = 0, fixed_abs, tag = 'sflag constant byte address 0x0 - dummy sync flag']
  #allocation18 [shape = 's32[]', space=sflag, size = 0x4, offset = 0, fixed_abs, tag = 'sflag constant byte address 0x0 - dummy sync flag']
  #allocation19 [shape = 's32[]', space=sflag, size = 0x4, offset = 0, fixed_abs, tag = 'sflag constant byte address 0x0 - dummy sync flag']
  %s0 = inlined_call_operand.hbm [shape: f32[2,8,256], index: 0, kind: input, shape index: {}]
  %s1 = inlined_call_operand.hbm [shape: f32[6,8,8], index: 1, kind: input, shape index: {}]
  %s2 = inlined_call_operand.hbm [shape: f32[6,8,8], index: 2, kind: input, shape index: {}]
  %s3 = inlined_call_operand.vmem [shape: f32[2,8,1], index: 3, kind: input, shape index: {}]
  %s4 = inlined_call_operand.vmem [shape: f32[8,1], index: 4, kind: input, shape index: {}]
  %s5 = inlined_call_operand.hbm [shape: f32[2,8,128], index: 5, kind: output, shape index: {}]
  %s6 = sld [smem:[#allocation0]]
  $region65: #{tpu_custom_call.1} parent=0
    _
  %s8 = ssub.s32 1, %s6
  %s9 = scalar_select 0, %s8, %s6
  $region1: #{tpu_custom_call.1} parent=0
    #allocation8 [shape = 'u8[8192]{0}', space=vmem, size = 0x2000, scoped, tag = 'output window, operand 0']
    #allocation9 [shape = 's32[2]{0}', space=sflag, size = 0x8, scoped, tag = 'scoped memory for tpu_custom_call.1']
    %10 = vsyncpa [#allocation9], 0
    %s11 = scalar_lea.sflag [#allocation9], 1
    %12 = vsyncpa %s11, 0
    loop: start=0, step=1, limit=4
    $region2: #{tpu_custom_call.1} parent=1 // loop_pre_header
      _
    $region3: #{tpu_custom_call.1} parent=1 // loop_header
      %s14 = sphi 0, %s18
      %p15 = scmp.ge.s32.totalorder %s14, 4
      %s21 = sphi 0, %s33
      %s22 = sphi 0, %s29
      %s23 = sphi 0, %s21
      %s24 = sphi 0, %s22
      %s25 = sphi 0, %s23
      %s26 = sphi 0, %s24
      %s34 = sphi 0, %s34
      %s36 = sphi 0, %s34
      %s37 = sphi 0, %s36
      %s51 = sphi 0, %s37
      %s55 = sphi 0, %s55
      %s57 = sphi 0, %s55
      %s58 = sphi 0, %s57
      %s72 = sphi 0, %s58
      %s80 = sphi 0, %s82
      %s83 = sphi 0, %s80
      %s84 = sphi 0, %s83
      %s100 = sphi 0, %s84
    $region4: #{tpu_custom_call.1} parent=1 // loop_header_branch
      %17 = sbr.rel (%p15) target = $region8
    $region5: #{tpu_custom_call.1} parent=1 // loop_body
      %s19 = ssub.s32 %s14, 1
      %s20 = ssub.s32 %s14, 2
      %s27 = sadd.s32 1, %s22
      %p28 = scmp.ge.s32.totalorder %s27, 1
      %s29 = scalar_select %p28, 0, %s27
      %s30 = sadd.s32 1, %s21
      %s31 = scalar_select %p28, %s30, %s21
      %p32 = scmp.ge.s32.totalorder %s31, 2
      %s33 = scalar_select %p32, 0, %s31
      %s35 = sadd.s32 %s34, 1
      %p38 = scmp.eq.s32.totalorder %s14, 1
      %p39 = scmp.ne.s32.totalorder %s34, %s36
      %p40 = scmp.eq.s32.totalorder %s14, 0
      %p41 = por %p39, %p40
      %p42 = scmp.ne.s32.totalorder %s34, %s36
      %p43 = scmp.eq.s32.totalorder %s19, 1
      %p44 = por %p42, %p43
      %p45 = scmp.ne.s32.totalorder %s36, %s37
      %p46 = scmp.eq.s32.totalorder %s19, 0
      %p47 = por %p45, %p46
      %p48 = scmp.ne.s32.totalorder %s36, %s37
      %p49 = scmp.eq.s32.totalorder %s20, 1
      %p50 = por %p48, %p49
      %p52 = scmp.ne.s32.totalorder %s37, %s51
      %p53 = scmp.eq.s32.totalorder %s20, 0
      %p54 = por %p52, %p53
      %s56 = sadd.s32 %s55, 1
      %p59 = scmp.eq.s32.totalorder %s14, 1
      %p60 = scmp.ne.s32.totalorder %s55, %s57
      %p61 = scmp.eq.s32.totalorder %s14, 0
      %p62 = por %p60, %p61
      %p63 = scmp.ne.s32.totalorder %s55, %s57
      %p64 = scmp.eq.s32.totalorder %s19, 1
      %p65 = por %p63, %p64
      %p66 = scmp.ne.s32.totalorder %s57, %s58
      %p67 = scmp.eq.s32.totalorder %s19, 0
      %p68 = por %p66, %p67
      %p69 = scmp.ne.s32.totalorder %s57, %s58
      %p70 = scmp.eq.s32.totalorder %s20, 1
      %p71 = por %p69, %p70
      %p73 = scmp.ne.s32.totalorder %s58, %s72
      %p74 = scmp.eq.s32.totalorder %s20, 0
      %p75 = por %p73, %p74
      %s76 = ssub.s32 %s21, %s33
      %s77 = ssub.s32 %s22, %s29
      %s78 = sor.u32 %s76, %s77
      %p79 = scmp.eq.s32.totalorder %s78, 0
      %s81 = sadd.s32 %s80, 1
      %s82 = scalar_select %p79, %s80, %s81
      %p85 = pneg %p79
      %p86 = scmp.eq.s32.totalorder %s14, 1
      %p87 = por %p85, %p86
      %p88 = scmp.ne.s32.totalorder %s80, %s83
      %p89 = scmp.eq.s32.totalorder %s14, 0
      %p90 = por %p88, %p89
      %p91 = scmp.ne.s32.totalorder %s80, %s83
      %p92 = scmp.eq.s32.totalorder %s19, 1
      %p93 = por %p91, %p92
      %p94 = scmp.ne.s32.totalorder %s83, %s84
      %p95 = scmp.eq.s32.totalorder %s19, 0
      %p96 = por %p94, %p95
      %p97 = scmp.ne.s32.totalorder %s83, %s84
      %p98 = scmp.eq.s32.totalorder %s20, 1
      %p99 = por %p97, %p98
      %p101 = scmp.ne.s32.totalorder %s84, %s100
      %p102 = scmp.eq.s32.totalorder %s20, 0
      %p103 = por %p101, %p102
      %p104 = scmp.le.s32.totalorder 1, %s14
      %p105 = scmp.lt.s32.totalorder %s14, 3
      %p106 = pnand %p104, %p105
      %p107 = pneg %p106
      // Predicated region
      $region9: #{tpu_custom_call.1} parent=5 // pred_check
        _
      $region10: #{tpu_custom_call.1} parent=5 // pred_check_branch
        %109 = sbr.rel (%p106) target = $region12
      $region11: #{tpu_custom_call.1} parent=5 // pred_region
        %s110 = ssub.s32 %s14, 1
        // Predicated region
        $region13: #{tpu_custom_call.1} parent=11 // pred_check
          %p111 = pneg %p47
        $region14: #{tpu_custom_call.1} parent=11 // pred_check_branch
          %113 = sbr.rel (%p111) target = $region16
        $region15: #{tpu_custom_call.1} parent=11 // pred_region
          _
        $region16: #{tpu_custom_call.1} parent=11 // pred_fallthru
          _
        // Predicated region
        $region17: #{tpu_custom_call.1} parent=11 // pred_check
          %p114 = pneg %p68
        $region18: #{tpu_custom_call.1} parent=11 // pred_check_branch
          %116 = sbr.rel (%p114) target = $region20
        $region19: #{tpu_custom_call.1} parent=11 // pred_region
          _
        $region20: #{tpu_custom_call.1} parent=11 // pred_fallthru
          _
      $region12: #{tpu_custom_call.1} parent=5 // pred_fallthru
        _
      %p117 = scmp.lt.s32.totalorder %s14, 2
      // Predicated region
      $region21: #{tpu_custom_call.1} parent=5 // pred_check
        %p118 = pneg %p117
      $region22: #{tpu_custom_call.1} parent=5 // pred_check_branch
        %120 = sbr.rel (%p118) target = $region24
      $region23: #{tpu_custom_call.1} parent=5 // pred_region
        _
      $region24: #{tpu_custom_call.1} parent=5 // pred_fallthru
        _
      %p121 = scmp.le.s32.totalorder 1, %s14
      %p122 = scmp.lt.s32.totalorder %s14, 3
      %p123 = pnand %p121, %p122
      %p124 = pneg %p123
      // Predicated region
      $region25: #{tpu_custom_call.1} parent=5 // pred_check
        _
      $region26: #{tpu_custom_call.1} parent=5 // pred_check_branch
        %126 = sbr.rel (%p123) target = $region28
      $region27: #{tpu_custom_call.1} parent=5 // pred_region
        %s127 = ssub.s32 %s14, 1
        %p128 = pneg %p47
        %p129 = pneg %p44
        %p130 = pneg %p68
        %p131 = pneg %p65
        %p132 = pneg %p96
        %p133 = pneg %p93
        %s134 = sand.u32 %s83, 1
        %s135 = scalar_lea.sflag [#allocation9], %s134
        %s136 = sand.u32 %s83, 1
        %s137 = smul.addr %s136, 8
        %s138 = scalar_lea.vmem [#allocation8], %s137
        %p139 = scmp.eq.s32.totalorder %s24, 0
        // Predicated region
        $region29: #{tpu_custom_call.1} parent=27 // pred_check
          %p140 = pneg %p139
        $region30: #{tpu_custom_call.1} parent=27 // pred_check_branch
          %142 = sbr.rel (%p140) target = $region32
        $region31: #{tpu_custom_call.1} parent=27 // pred_region
          %s143 = smul.u32 %s24, 128
          %s144 = sshra.s32 %s143, 7
          %s145 = sand.u32 %s143, 127
          %s146 = smul.u32 %s23, 2
          %s147 = sadd.s32 %s144, %s146
          %s148 = smul.addr %s147, 8
          %s149 = scalar_lea.hbm %s0, %s148
          // Predicated region
          $region33: #{tpu_custom_call.1} parent=31 // pred_check
            _
          $region34: #{tpu_custom_call.1} parent=31 // pred_check_branch
            %151 = sbr.rel target = $region36
          $region35: #{tpu_custom_call.1} parent=31 // pred_region
            %152 = sst [smem:[#allocation12]] [#allocation11]
            %153 = sst [smem:[#allocation13]] [#allocation10]
          $region36: #{tpu_custom_call.1} parent=31 // pred_fallthru
            _
          %155 = shalt.err (0)
          %s157 = sshll.u32 %s149, 4
          %s158 = int_to_ptr.hbm [resolvable:$true] %s157
          %s159 = sshll.u32 [#allocation2], 4
          %s160 = int_to_ptr.vmem [resolvable:$true] %s159
          %162 = dma.hbm_to_vmem [thread:$0]  %s158, 256, %s160, [#allocation6]
          // Predicated region
          $region37: #{tpu_custom_call.1} parent=31 // pred_check
            _
          $region38: #{tpu_custom_call.1} parent=31 // pred_check_branch
            %164 = sbr.rel target = $region40
          $region39: #{tpu_custom_call.1} parent=31 // pred_region
            %165 = sst [smem:[#allocation12]] [#allocation15]
            %166 = sst [smem:[#allocation13]] [#allocation14]
          $region40: #{tpu_custom_call.1} parent=31 // pred_fallthru
            _
          %168 = shalt.err (0)
          %s170 = sshll.u32 %s1, 4
          %s171 = int_to_ptr.hbm [resolvable:$true] %s170
          %s172 = sshll.u32 [#allocation3], 4
          %s173 = int_to_ptr.vmem [resolvable:$true] %s172
          %175 = dma.hbm_to_vmem [thread:$0]  %s171, 768, %s173, [#allocation7]
          %s176 = scalar_lea.sflag [#allocation7], 1
          // Predicated region
          $region41: #{tpu_custom_call.1} parent=31 // pred_check
            _
          $region42: #{tpu_custom_call.1} parent=31 // pred_check_branch
            %178 = sbr.rel target = $region44
          $region43: #{tpu_custom_call.1} parent=31 // pred_region
            %179 = sst [smem:[#allocation12]] [#allocation17]
            %180 = sst [smem:[#allocation13]] [#allocation16]
          $region44: #{tpu_custom_call.1} parent=31 // pred_fallthru
            _
          %182 = shalt.err (0)
          %s184 = sshll.u32 %s2, 4
          %s185 = int_to_ptr.hbm [resolvable:$true] %s184
          %s186 = sshll.u32 [#allocation4], 4
          %s187 = int_to_ptr.vmem [resolvable:$true] %s186
          %189 = dma.hbm_to_vmem [thread:$0]  %s185, 768, %s187, %s176
          %s190 = smul.u32 6, 8
          %s191 = smul.u32 %s190, 1
          %s192 = sshll.u32 %s191, 4
          %193 = dma.done [#allocation7], %s192
          %s194 = sshll.u32 %s191, 4
          %195 = dma.done %s176, %s194
        $region32: #{tpu_custom_call.1} parent=27 // pred_fallthru
          _
        %p196 = scmp.lt.s32.totalorder %s24, 0
        %s197 = ssub.s32 0, %s24
        %s198 = scalar_select %p196, %s197, %s24
        %s199 = sand.u32 %s198, 1
        %s200 = ssub.s32 0, %s199
        %s201 = scalar_select %p196, %s200, %s199
        %p202 = scmp.ne.s32.totalorder %s201, 0
        %p203 = scmp.lt.s32.totalorder %s201, 0
        %p204 = pnand %p203, %p202
        %p205 = pneg %p204
        %s206 = sadd.s32 %s201, 2
        %s207 = scalar_select %p205, %s206, %s201
        %s208 = sadd.s32 %s24, 1
        %p209 = scmp.lt.s32.totalorder %s208, 1
        // Predicated region
        $region45: #{tpu_custom_call.1} parent=27 // pred_check
          %p210 = pneg %p209
        $region46: #{tpu_custom_call.1} parent=27 // pred_check_branch
          %212 = sbr.rel (%p210) target = $region48
        $region47: #{tpu_custom_call.1} parent=27 // pred_region
          %p213 = scmp.lt.s32.totalorder %s208, 0
          %s214 = ssub.s32 0, %s208
          %s215 = scalar_select %p213, %s214, %s208
          %s216 = sand.u32 %s215, 1
          %s217 = ssub.s32 0, %s216
          %s218 = scalar_select %p213, %s217, %s216
          %p219 = scmp.ne.s32.totalorder %s218, 0
          %p220 = scmp.lt.s32.totalorder %s218, 0
          %p221 = pnand %p220, %p219
          %p222 = pneg %p221
          %s223 = sadd.s32 %s218, 2
          %s224 = scalar_select %p222, %s223, %s218
          %s225 = smul.u32 %s208, 128
          %s226 = sshra.s32 %s225, 7
          %s227 = sand.u32 %s225, 127
          %s228 = smul.u32 %s23, 2
          %s229 = sadd.s32 %s226, %s228
          %s230 = smul.addr %s229, 8
          %s231 = scalar_lea.hbm %s0, %s230
          %s232 = smul.u32 %s224, 2
          %s233 = smul.addr %s232, 8
          %s234 = scalar_lea.vmem [#allocation2], %s233
          %s235 = scalar_lea.sflag [#allocation6], %s224
          // Predicated region
          $region49: #{tpu_custom_call.1} parent=47 // pred_check
            _
          $region50: #{tpu_custom_call.1} parent=47 // pred_check_branch
            %237 = sbr.rel target = $region52
          $region51: #{tpu_custom_call.1} parent=47 // pred_region
            %238 = sst [smem:[#allocation12]] [#allocation19]
            %239 = sst [smem:[#allocation13]] [#allocation18]
          $region52: #{tpu_custom_call.1} parent=47 // pred_fallthru
            _
          %241 = shalt.err (0)
          %s243 = sshll.u32 %s231, 4
          %s244 = int_to_ptr.hbm [resolvable:$true] %s243
          %s245 = sshll.u32 %s234, 4
          %s246 = int_to_ptr.vmem [resolvable:$true] %s245
          %248 = dma.hbm_to_vmem [thread:$0]  %s244, 256, %s246, %s235
        $region48: #{tpu_custom_call.1} parent=27 // pred_fallthru
          _
        %s249 = smul.u32 %s24, 128
        %s250 = smul.u32 %s207, 2
        %s251 = smul.addr %s250, 8
        %s252 = scalar_lea.vmem [#allocation2], %s251
        %s253 = scalar_lea.sflag [#allocation6], %s207
        %s254 = smul.u32 8, 1
        %s255 = smul.u32 %s254, 2
        %s256 = sshll.u32 %s255, 4
        %257 = dma.done %s253, %s256
        %v258 = vld [vmem:[%s252] sm:$0xff]
        %v259 = vld [vmem:[%s252 + $0x8] sm:$0xff]
        %vm260 = vcmp.gt.f32.partialorder %v258, 0.0
        %vm261 = vcmp.gt.f32.partialorder %v259, 0.0
        %v262 = vmul.f32 %v258, 0.01
        %v263 = vmul.f32 %v259, 0.01
        %v264 = vsel %vm260, %v258, %v262
        %v265 = vsel %vm261, %v259, %v263
        %v266 = vlaneseq
        %v267 = vand.u32 %v266, 127
        %v268 = vadd.s32 %v267, 128
        %v269 = vstv %s249
        %v270 = vadd.s32 %v269, %v267
        %v271 = vadd.s32 %v269, %v268
        %v272 = vsub.s32 %v270, 1
        %v273 = vsub.s32 %v271, 1
        %vm274 = vcmp.ge.s32.totalorder %v272, 0
        %vm275 = vcmp.ge.s32.totalorder %v273, 0
        %vm276 = vcmp.lt.s32.totalorder %v272, 16
        %vm277 = vcmp.lt.s32.totalorder %v273, 16
        %vm278 = vmand %vm274, %vm276
        %vm279 = vmand %vm275, %vm277
        %v280 = vld [vmem:[%s4] sm:$0xff]
        %282 = vset.pattern.permute.xlu0 0
        %283 = vperm.xlu0 %282, %v280
        %v284 = vpop.permute.xlu0 %283
        %286 = vst [vmem:[#allocation5] sm:$0xff] %v284
        %v287 = vld [vmem:[#allocation3] sm:$0xff]
        %s288 = scalar_lea.vmem [#allocation3], 8
        %v289 = vld [vmem:[%s288] sm:$0xff]
        %292 = vrot.lane.b32.xlu0 %v264, 125
        %v293 = vpop.permute.xlu0 %292
        %294 = vrot.lane.b32.xlu0 %v265, 125
        %v295 = vpop.permute.xlu0 %294
        %vm296 = vcmask 1022976
        %v297 = vsel %vm296, %v293, %v295
        %vm300 = vcmask 64512
        %v302 = vsel %vm300, %v289, 0
        %304 = vmatpush.msra.mxu0 0.0
        %305 = vmatpush.msra.mxu0 0.0
        %306 = vmatpush.msra.mxu0 0.0
        %307 = vmatpush.msra.mxu0 0.0
        %308 = vmatpush.msra.mxu0 0.0
        %309 = vmatpush.msra.mxu0 0.0
        %310 = vmatpush.msra.mxu0 0.0
        %311 = vmatpush.msra.mxu0 0.0
        %312 = vmatpush.msra.mxu0 0.0
        %313 = vmatpush.msra.mxu0 0.0
        %314 = vmatpush.msra.mxu0 0.0
        %315 = vmatpush.msra.mxu0 0.0
        %316 = vmatpush.msra.mxu0 0.0
        %317 = vmatpush.msra.mxu0 0.0
        %318 = vmatpush.msra.mxu0 0.0
        %319 = vmatpush.msra.mxu0 %v297
        %320 = vmatmul.f32.gmra.mxu0 %v302
        %v321 = vpop.f32.mrf.mxu0
        %v322 = vadd.f32 0.0, %v321
        %323 = vdwg.mxu0
        %324 = vmatpush.msra.mxu0 0.0
        %325 = vmatpush.msra.mxu0 0.0
        %326 = vmatpush.msra.mxu0 0.0
        %327 = vmatpush.msra.mxu0 0.0
        %328 = vmatpush.msra.mxu0 0.0
        %329 = vmatpush.msra.mxu0 0.0
        %330 = vmatpush.msra.mxu0 0.0
        %331 = vmatpush.msra.mxu0 0.0
        %332 = vmatpush.msra.mxu0 0.0
        %333 = vmatpush.msra.mxu0 0.0
        %334 = vmatpush.msra.mxu0 0.0
        %335 = vmatpush.msra.mxu0 0.0
        %336 = vmatpush.msra.mxu0 0.0
        %337 = vmatpush.msra.mxu0 0.0
        %338 = vmatpush.msra.mxu0 0.0
        %339 = vmatpush.msra.mxu0 %v295
        %340 = vmatmul.f32.gmra.mxu0 %v302
        %v341 = vpop.f32.mrf.mxu0
        %v342 = vadd.f32 0.0, %v341
        %343 = vdwg.mxu0
        %344 = vrot.lane.b32.xlu0 %v264, 126
        %v345 = vpop.permute.xlu0 %344
        %346 = vrot.lane.b32.xlu0 %v265, 126
        %v347 = vpop.permute.xlu0 %346
        %vm348 = vcmask 1031168
        %v349 = vsel %vm348, %v345, %v347
        %v353 = vsel %vm300, %v287, 0
        %355 = vmatpush.msra.mxu0 0.0
        %356 = vmatpush.msra.mxu0 0.0
        %357 = vmatpush.msra.mxu0 0.0
        %358 = vmatpush.msra.mxu0 0.0
        %359 = vmatpush.msra.mxu0 0.0
        %360 = vmatpush.msra.mxu0 0.0
        %361 = vmatpush.msra.mxu0 0.0
        %362 = vmatpush.msra.mxu0 0.0
        %363 = vmatpush.msra.mxu0 0.0
        %364 = vmatpush.msra.mxu0 0.0
        %365 = vmatpush.msra.mxu0 0.0
        %366 = vmatpush.msra.mxu0 0.0
        %367 = vmatpush.msra.mxu0 0.0
        %368 = vmatpush.msra.mxu0 0.0
        %369 = vmatpush.msra.mxu0 0.0
        %370 = vmatpush.msra.mxu0 %v349
        %371 = vmatmul.f32.gmra.mxu0 %v353
        %v372 = vpop.f32.mrf.mxu0
        %v373 = vadd.f32 %v322, %v372
        %374 = vdwg.mxu0
        %375 = vmatpush.msra.mxu0 0.0
        %376 = vmatpush.msra.mxu0 0.0
        %377 = vmatpush.msra.mxu0 0.0
        %378 = vmatpush.msra.mxu0 0.0
        %379 = vmatpush.msra.mxu0 0.0
        %380 = vmatpush.msra.mxu0 0.0
        %381 = vmatpush.msra.mxu0 0.0
        %382 = vmatpush.msra.mxu0 0.0
        %383 = vmatpush.msra.mxu0 0.0
        %384 = vmatpush.msra.mxu0 0.0
        %385 = vmatpush.msra.mxu0 0.0
        %386 = vmatpush.msra.mxu0 0.0
        %387 = vmatpush.msra.mxu0 0.0
        %388 = vmatpush.msra.mxu0 0.0
        %389 = vmatpush.msra.mxu0 0.0
        %390 = vmatpush.msra.mxu0 %v347
        %391 = vmatmul.f32.gmra.mxu0 %v353
        %v392 = vpop.f32.mrf.mxu0
        %v393 = vadd.f32 %v342, %v392
        %394 = vdwg.mxu0
        %s395 = scalar_lea.vmem [#allocation3], 16
        %v396 = vld [vmem:[%s395] sm:$0xff]
        %397 = vrot.lane.b32.xlu0 %v264, 124
        %v398 = vpop.permute.xlu0 %397
        %399 = vrot.lane.b32.xlu0 %v265, 124
        %v400 = vpop.permute.xlu0 %399
        %vm401 = vcmask 1014784
        %v402 = vsel %vm401, %v398, %v400
        %v406 = vsel %vm300, %v396, 0
        %408 = vmatpush.msra.mxu0 0.0
        %409 = vmatpush.msra.mxu0 0.0
        %410 = vmatpush.msra.mxu0 0.0
        %411 = vmatpush.msra.mxu0 0.0
        %412 = vmatpush.msra.mxu0 0.0
        %413 = vmatpush.msra.mxu0 0.0
        %414 = vmatpush.msra.mxu0 0.0
        %415 = vmatpush.msra.mxu0 0.0
        %416 = vmatpush.msra.mxu0 0.0
        %417 = vmatpush.msra.mxu0 0.0
        %418 = vmatpush.msra.mxu0 0.0
        %419 = vmatpush.msra.mxu0 0.0
        %420 = vmatpush.msra.mxu0 0.0
        %421 = vmatpush.msra.mxu0 0.0
        %422 = vmatpush.msra.mxu0 0.0
        %423 = vmatpush.msra.mxu0 %v402
        %424 = vmatmul.f32.gmra.mxu0 %v406
        %v425 = vpop.f32.mrf.mxu0
        %v426 = vadd.f32 0.0, %v425
        %427 = vdwg.mxu0
        %428 = vmatpush.msra.mxu0 0.0
        %429 = vmatpush.msra.mxu0 0.0
        %430 = vmatpush.msra.mxu0 0.0
        %431 = vmatpush.msra.mxu0 0.0
        %432 = vmatpush.msra.mxu0 0.0
        %433 = vmatpush.msra.mxu0 0.0
        %434 = vmatpush.msra.mxu0 0.0
        %435 = vmatpush.msra.mxu0 0.0
        %436 = vmatpush.msra.mxu0 0.0
        %437 = vmatpush.msra.mxu0 0.0
        %438 = vmatpush.msra.mxu0 0.0
        %439 = vmatpush.msra.mxu0 0.0
        %440 = vmatpush.msra.mxu0 0.0
        %441 = vmatpush.msra.mxu0 0.0
        %442 = vmatpush.msra.mxu0 0.0
        %443 = vmatpush.msra.mxu0 %v400
        %444 = vmatmul.f32.gmra.mxu0 %v406
        %v445 = vpop.f32.mrf.mxu0
        %v446 = vadd.f32 0.0, %v445
        %447 = vdwg.mxu0
        %v448 = vadd.f32 %v373, %v426
        %v449 = vadd.f32 %v393, %v446
        %v450 = vld [vmem:[%s3] sm:$0xff]
        %452 = vset.pattern.permute.xlu0 0
        %453 = vperm.xlu0 %452, %v450
        %v454 = vpop.permute.xlu0 %453
        %v456 = vadd.f32 %v448, %v454
        %v457 = vadd.f32 %v449, %v454
        %vm458 = vcmp.gt.f32.partialorder %v456, 0.0
        %vm459 = vcmp.gt.f32.partialorder %v457, 0.0
        %v460 = vmul.f32 %v456, 0.01
        %v461 = vmul.f32 %v457, 0.01
        %v462 = vsel %vm458, %v456, %v460
        %v463 = vsel %vm459, %v457, %v461
        %v464 = vsel %vm278, 1, 0
        %v465 = vsel %vm279, 1, 0
        %vm466 = vcmp.eq.s32.totalorder %v464, 1
        %vm467 = vcmp.eq.s32.totalorder %v465, 1
        %v468 = vsel %vm466, %v462, 0.0
        %v469 = vsel %vm467, %v463, 0.0
        %v470 = vld [vmem:[#allocation5] sm:$0xff]
        %v471 = vld [vmem:[#allocation4] sm:$0xff]
        %v473 = vsel %vm300, %v471, 0
        %475 = vmatpush.msra.mxu0 0.0
        %476 = vmatpush.msra.mxu0 0.0
        %477 = vmatpush.msra.mxu0 0.0
        %478 = vmatpush.msra.mxu0 0.0
        %479 = vmatpush.msra.mxu0 0.0
        %480 = vmatpush.msra.mxu0 0.0
        %481 = vmatpush.msra.mxu0 0.0
        %482 = vmatpush.msra.mxu0 0.0
        %483 = vmatpush.msra.mxu0 0.0
        %484 = vmatpush.msra.mxu0 0.0
        %485 = vmatpush.msra.mxu0 0.0
        %486 = vmatpush.msra.mxu0 0.0
        %487 = vmatpush.msra.mxu0 0.0
        %488 = vmatpush.msra.mxu0 0.0
        %489 = vmatpush.msra.mxu0 0.0
        %490 = vmatpush.msra.mxu0 %v468
        %491 = vmatmul.f32.gmra.mxu0 %v473
        %v492 = vpop.f32.mrf.mxu0
        %v493 = vadd.f32 0.0, %v492
        %494 = vdwg.mxu0
        %v495 = vadd.f32 %v470, %v493
        %496 = vst [vmem:[#allocation5] sm:$0xff] %v495
        %v497 = vld [vmem:[#allocation5] sm:$0xff]
        %s498 = scalar_lea.vmem [#allocation4], 8
        %v499 = vld [vmem:[%s498] sm:$0xff]
        %502 = vrot.lane.b32.xlu0 %v468, 127
        %v503 = vpop.permute.xlu0 %502
        %504 = vrot.lane.b32.xlu0 %v469, 127
        %v505 = vpop.permute.xlu0 %504
        %vm506 = vcmask 1039360
        %v507 = vsel %vm506, %v503, %v505
        %v510 = vsel %vm300, %v499, 0
        %512 = vmatpush.msra.mxu0 0.0
        %513 = vmatpush.msra.mxu0 0.0
        %514 = vmatpush.msra.mxu0 0.0
        %515 = vmatpush.msra.mxu0 0.0
        %516 = vmatpush.msra.mxu0 0.0
        %517 = vmatpush.msra.mxu0 0.0
        %518 = vmatpush.msra.mxu0 0.0
        %519 = vmatpush.msra.mxu0 0.0
        %520 = vmatpush.msra.mxu0 0.0
        %521 = vmatpush.msra.mxu0 0.0
        %522 = vmatpush.msra.mxu0 0.0
        %523 = vmatpush.msra.mxu0 0.0
        %524 = vmatpush.msra.mxu0 0.0
        %525 = vmatpush.msra.mxu0 0.0
        %526 = vmatpush.msra.mxu0 0.0
        %527 = vmatpush.msra.mxu0 %v507
        %528 = vmatmul.f32.gmra.mxu0 %v510
        %v529 = vpop.f32.mrf.mxu0
        %v530 = vadd.f32 0.0, %v529
        %531 = vdwg.mxu0
        %v532 = vadd.f32 %v497, %v530
        %533 = vst [vmem:[#allocation5] sm:$0xff] %v532
        %v534 = vld [vmem:[#allocation5] sm:$0xff]
        %s535 = scalar_lea.vmem [#allocation4], 16
        %v536 = vld [vmem:[%s535] sm:$0xff]
        %537 = vrot.lane.b32.xlu0 %v468, 126
        %v538 = vpop.permute.xlu0 %537
        %539 = vrot.lane.b32.xlu0 %v469, 126
        %v540 = vpop.permute.xlu0 %539
        %v541 = vsel %vm348, %v538, %v540
        %v544 = vsel %vm300, %v536, 0
        %546 = vmatpush.msra.mxu0 0.0
        %547 = vmatpush.msra.mxu0 0.0
        %548 = vmatpush.msra.mxu0 0.0
        %549 = vmatpush.msra.mxu0 0.0
        %550 = vmatpush.msra.mxu0 0.0
        %551 = vmatpush.msra.mxu0 0.0
        %552 = vmatpush.msra.mxu0 0.0
        %553 = vmatpush.msra.mxu0 0.0
        %554 = vmatpush.msra.mxu0 0.0
        %555 = vmatpush.msra.mxu0 0.0
        %556 = vmatpush.msra.mxu0 0.0
        %557 = vmatpush.msra.mxu0 0.0
        %558 = vmatpush.msra.mxu0 0.0
        %559 = vmatpush.msra.mxu0 0.0
        %560 = vmatpush.msra.mxu0 0.0
        %561 = vmatpush.msra.mxu0 %v541
        %562 = vmatmul.f32.gmra.mxu0 %v544
        %v563 = vpop.f32.mrf.mxu0
        %v564 = vadd.f32 0.0, %v563
        %565 = vdwg.mxu0
        %v566 = vadd.f32 %v534, %v564
        %567 = vst [vmem:[#allocation5] sm:$0xff] %v566
        %s568 = scalar_lea.vmem [#allocation3], 24
        %v569 = vld [vmem:[%s568] sm:$0xff]
        %s570 = scalar_lea.vmem [#allocation3], 32
        %v571 = vld [vmem:[%s570] sm:$0xff]
        %v573 = vsel %vm300, %v571, 0
        %575 = vmatpush.msra.mxu0 0.0
        %576 = vmatpush.msra.mxu0 0.0
        %577 = vmatpush.msra.mxu0 0.0
        %578 = vmatpush.msra.mxu0 0.0
        %579 = vmatpush.msra.mxu0 0.0
        %580 = vmatpush.msra.mxu0 0.0
        %581 = vmatpush.msra.mxu0 0.0
        %582 = vmatpush.msra.mxu0 0.0
        %583 = vmatpush.msra.mxu0 0.0
        %584 = vmatpush.msra.mxu0 0.0
        %585 = vmatpush.msra.mxu0 0.0
        %586 = vmatpush.msra.mxu0 0.0
        %587 = vmatpush.msra.mxu0 0.0
        %588 = vmatpush.msra.mxu0 0.0
        %589 = vmatpush.msra.mxu0 0.0
        %590 = vmatpush.msra.mxu0 %v297
        %591 = vmatmul.f32.gmra.mxu0 %v573
        %v592 = vpop.f32.mrf.mxu0
        %v593 = vadd.f32 0.0, %v592
        %594 = vdwg.mxu0
        %595 = vmatpush.msra.mxu0 0.0
        %596 = vmatpush.msra.mxu0 0.0
        %597 = vmatpush.msra.mxu0 0.0
        %598 = vmatpush.msra.mxu0 0.0
        %599 = vmatpush.msra.mxu0 0.0
        %600 = vmatpush.msra.mxu0 0.0
        %601 = vmatpush.msra.mxu0 0.0
        %602 = vmatpush.msra.mxu0 0.0
        %603 = vmatpush.msra.mxu0 0.0
        %604 = vmatpush.msra.mxu0 0.0
        %605 = vmatpush.msra.mxu0 0.0
        %606 = vmatpush.msra.mxu0 0.0
        %607 = vmatpush.msra.mxu0 0.0
        %608 = vmatpush.msra.mxu0 0.0
        %609 = vmatpush.msra.mxu0 0.0
        %610 = vmatpush.msra.mxu0 %v295
        %611 = vmatmul.f32.gmra.mxu0 %v573
        %v612 = vpop.f32.mrf.mxu0
        %v613 = vadd.f32 0.0, %v612
        %614 = vdwg.mxu0
        %v616 = vsel %vm300, %v569, 0
        %618 = vmatpush.msra.mxu0 0.0
        %619 = vmatpush.msra.mxu0 0.0
        %620 = vmatpush.msra.mxu0 0.0
        %621 = vmatpush.msra.mxu0 0.0
        %622 = vmatpush.msra.mxu0 0.0
        %623 = vmatpush.msra.mxu0 0.0
        %624 = vmatpush.msra.mxu0 0.0
        %625 = vmatpush.msra.mxu0 0.0
        %626 = vmatpush.msra.mxu0 0.0
        %627 = vmatpush.msra.mxu0 0.0
        %628 = vmatpush.msra.mxu0 0.0
        %629 = vmatpush.msra.mxu0 0.0
        %630 = vmatpush.msra.mxu0 0.0
        %631 = vmatpush.msra.mxu0 0.0
        %632 = vmatpush.msra.mxu0 0.0
        %633 = vmatpush.msra.mxu0 %v264
        %634 = vmatmul.f32.gmra.mxu0 %v616
        %v635 = vpop.f32.mrf.mxu0
        %v636 = vadd.f32 %v593, %v635
        %637 = vdwg.mxu0
        %638 = vmatpush.msra.mxu0 0.0
        %639 = vmatpush.msra.mxu0 0.0
        %640 = vmatpush.msra.mxu0 0.0
        %641 = vmatpush.msra.mxu0 0.0
        %642 = vmatpush.msra.mxu0 0.0
        %643 = vmatpush.msra.mxu0 0.0
        %644 = vmatpush.msra.mxu0 0.0
        %645 = vmatpush.msra.mxu0 0.0
        %646 = vmatpush.msra.mxu0 0.0
        %647 = vmatpush.msra.mxu0 0.0
        %648 = vmatpush.msra.mxu0 0.0
        %649 = vmatpush.msra.mxu0 0.0
        %650 = vmatpush.msra.mxu0 0.0
        %651 = vmatpush.msra.mxu0 0.0
        %652 = vmatpush.msra.mxu0 0.0
        %653 = vmatpush.msra.mxu0 %v265
        %654 = vmatmul.f32.gmra.mxu0 %v616
        %v655 = vpop.f32.mrf.mxu0
        %v656 = vadd.f32 %v613, %v655
        %657 = vdwg.mxu0
        %s658 = scalar_lea.vmem [#allocation3], 40
        %v659 = vld [vmem:[%s658] sm:$0xff]
        %660 = vrot.lane.b32.xlu0 %v264, 122
        %v661 = vpop.permute.xlu0 %660
        %662 = vrot.lane.b32.xlu0 %v265, 122
        %v663 = vpop.permute.xlu0 %662
        %vm664 = vcmask 998400
        %v665 = vsel %vm664, %v661, %v663
        %v669 = vsel %vm300, %v659, 0
        %671 = vmatpush.msra.mxu0 0.0
        %672 = vmatpush.msra.mxu0 0.0
        %673 = vmatpush.msra.mxu0 0.0
        %674 = vmatpush.msra.mxu0 0.0
        %675 = vmatpush.msra.mxu0 0.0
        %676 = vmatpush.msra.mxu0 0.0
        %677 = vmatpush.msra.mxu0 0.0
        %678 = vmatpush.msra.mxu0 0.0
        %679 = vmatpush.msra.mxu0 0.0
        %680 = vmatpush.msra.mxu0 0.0
        %681 = vmatpush.msra.mxu0 0.0
        %682 = vmatpush.msra.mxu0 0.0
        %683 = vmatpush.msra.mxu0 0.0
        %684 = vmatpush.msra.mxu0 0.0
        %685 = vmatpush.msra.mxu0 0.0
        %686 = vmatpush.msra.mxu0 %v665
        %687 = vmatmul.f32.gmra.mxu0 %v669
        %v688 = vpop.f32.mrf.mxu0
        %v689 = vadd.f32 0.0, %v688
        %690 = vdwg.mxu0
        %691 = vmatpush.msra.mxu0 0.0
        %692 = vmatpush.msra.mxu0 0.0
        %693 = vmatpush.msra.mxu0 0.0
        %694 = vmatpush.msra.mxu0 0.0
        %695 = vmatpush.msra.mxu0 0.0
        %696 = vmatpush.msra.mxu0 0.0
        %697 = vmatpush.msra.mxu0 0.0
        %698 = vmatpush.msra.mxu0 0.0
        %699 = vmatpush.msra.mxu0 0.0
        %700 = vmatpush.msra.mxu0 0.0
        %701 = vmatpush.msra.mxu0 0.0
        %702 = vmatpush.msra.mxu0 0.0
        %703 = vmatpush.msra.mxu0 0.0
        %704 = vmatpush.msra.mxu0 0.0
        %705 = vmatpush.msra.mxu0 0.0
        %706 = vmatpush.msra.mxu0 %v663
        %707 = vmatmul.f32.gmra.mxu0 %v669
        %v708 = vpop.f32.mrf.mxu0
        %v709 = vadd.f32 0.0, %v708
        %710 = vdwg.mxu0
        %v711 = vadd.f32 %v636, %v689
        %v712 = vadd.f32 %v656, %v709
        %s713 = scalar_lea.vmem %s3, 8
        %v714 = vld [vmem:[%s713] sm:$0xff]
        %716 = vset.pattern.permute.xlu0 0
        %717 = vperm.xlu0 %716, %v714
        %v718 = vpop.permute.xlu0 %717
        %v720 = vadd.f32 %v711, %v718
        %v721 = vadd.f32 %v712, %v718
        %vm722 = vcmp.gt.f32.partialorder %v720, 0.0
        %vm723 = vcmp.gt.f32.partialorder %v721, 0.0
        %v724 = vmul.f32 %v720, 0.01
        %v725 = vmul.f32 %v721, 0.01
        %v726 = vsel %vm722, %v720, %v724
        %v727 = vsel %vm723, %v721, %v725
        %v728 = vsel %vm466, %v726, 0.0
        %v729 = vsel %vm467, %v727, 0.0
        %v730 = vld [vmem:[#allocation5] sm:$0xff]
        %s731 = scalar_lea.vmem [#allocation4], 24
        %v732 = vld [vmem:[%s731] sm:$0xff]
        %v734 = vsel %vm300, %v732, 0
        %736 = vmatpush.msra.mxu0 0.0
        %737 = vmatpush.msra.mxu0 0.0
        %738 = vmatpush.msra.mxu0 0.0
        %739 = vmatpush.msra.mxu0 0.0
        %740 = vmatpush.msra.mxu0 0.0
        %741 = vmatpush.msra.mxu0 0.0
        %742 = vmatpush.msra.mxu0 0.0
        %743 = vmatpush.msra.mxu0 0.0
        %744 = vmatpush.msra.mxu0 0.0
        %745 = vmatpush.msra.mxu0 0.0
        %746 = vmatpush.msra.mxu0 0.0
        %747 = vmatpush.msra.mxu0 0.0
        %748 = vmatpush.msra.mxu0 0.0
        %749 = vmatpush.msra.mxu0 0.0
        %750 = vmatpush.msra.mxu0 0.0
        %751 = vmatpush.msra.mxu0 %v728
        %752 = vmatmul.f32.gmra.mxu0 %v734
        %v753 = vpop.f32.mrf.mxu0
        %v754 = vadd.f32 0.0, %v753
        %755 = vdwg.mxu0
        %v756 = vadd.f32 %v730, %v754
        %757 = vst [vmem:[#allocation5] sm:$0xff] %v756
        %v758 = vld [vmem:[#allocation5] sm:$0xff]
        %s759 = scalar_lea.vmem [#allocation4], 32
        %v760 = vld [vmem:[%s759] sm:$0xff]
        %763 = vrot.lane.b32.xlu0 %v728, 127
        %v764 = vpop.permute.xlu0 %763
        %765 = vrot.lane.b32.xlu0 %v729, 127
        %v766 = vpop.permute.xlu0 %765
        %v767 = vsel %vm506, %v764, %v766
        %v770 = vsel %vm300, %v760, 0
        %772 = vmatpush.msra.mxu0 0.0
        %773 = vmatpush.msra.mxu0 0.0
        %774 = vmatpush.msra.mxu0 0.0
        %775 = vmatpush.msra.mxu0 0.0
        %776 = vmatpush.msra.mxu0 0.0
        %777 = vmatpush.msra.mxu0 0.0
        %778 = vmatpush.msra.mxu0 0.0
        %779 = vmatpush.msra.mxu0 0.0
        %780 = vmatpush.msra.mxu0 0.0
        %781 = vmatpush.msra.mxu0 0.0
        %782 = vmatpush.msra.mxu0 0.0
        %783 = vmatpush.msra.mxu0 0.0
        %784 = vmatpush.msra.mxu0 0.0
        %785 = vmatpush.msra.mxu0 0.0
        %786 = vmatpush.msra.mxu0 0.0
        %787 = vmatpush.msra.mxu0 %v767
        %788 = vmatmul.f32.gmra.mxu0 %v770
        %v789 = vpop.f32.mrf.mxu0
        %v790 = vadd.f32 0.0, %v789
        %791 = vdwg.mxu0
        %v792 = vadd.f32 %v758, %v790
        %793 = vst [vmem:[#allocation5] sm:$0xff] %v792
        %v794 = vld [vmem:[#allocation5] sm:$0xff]
        %s795 = scalar_lea.vmem [#allocation4], 40
        %v796 = vld [vmem:[%s795] sm:$0xff]
        %797 = vrot.lane.b32.xlu0 %v728, 126
        %v798 = vpop.permute.xlu0 %797
        %799 = vrot.lane.b32.xlu0 %v729, 126
        %v800 = vpop.permute.xlu0 %799
        %v801 = vsel %vm348, %v798, %v800
        %v804 = vsel %vm300, %v796, 0
        %806 = vmatpush.msra.mxu0 0.0
        %807 = vmatpush.msra.mxu0 0.0
        %808 = vmatpush.msra.mxu0 0.0
        %809 = vmatpush.msra.mxu0 0.0
        %810 = vmatpush.msra.mxu0 0.0
        %811 = vmatpush.msra.mxu0 0.0
        %812 = vmatpush.msra.mxu0 0.0
        %813 = vmatpush.msra.mxu0 0.0
        %814 = vmatpush.msra.mxu0 0.0
        %815 = vmatpush.msra.mxu0 0.0
        %816 = vmatpush.msra.mxu0 0.0
        %817 = vmatpush.msra.mxu0 0.0
        %818 = vmatpush.msra.mxu0 0.0
        %819 = vmatpush.msra.mxu0 0.0
        %820 = vmatpush.msra.mxu0 0.0
        %821 = vmatpush.msra.mxu0 %v801
        %822 = vmatmul.f32.gmra.mxu0 %v804
        %v823 = vpop.f32.mrf.mxu0
        %v824 = vadd.f32 0.0, %v823
        %825 = vdwg.mxu0
        %v826 = vadd.f32 %v794, %v824
        %827 = vst [vmem:[#allocation5] sm:$0xff] %v826
        %v828 = vld [vmem:[#allocation5] sm:$0xff]
        %829 = vst [vmem:[%s138] sm:$0xff] %v828
        %s830 = sand.u32 %s83, 1
        %s831 = scalar_lea.sflag [#allocation9], %s830
        %s832 = sand.u32 %s83, 1
        %s833 = smul.addr %s832, 8
        %s834 = scalar_lea.vmem [#allocation8], %s833
        // Predicated region
        $region53: #{tpu_custom_call.1} parent=27 // pred_check
          %p835 = pneg %p93
        $region54: #{tpu_custom_call.1} parent=27 // pred_check_branch
          %837 = sbr.rel (%p835) target = $region56
        $region55: #{tpu_custom_call.1} parent=27 // pred_region
          %839 = vsyncadd %s831, 0
          %s840 = sadd.s32 %s24, %s23
          %s841 = smul.addr %s840, 8
          %s842 = scalar_lea.hbm %s5, %s841
          %s844 = sshll.u32 %s834, 4
          %s845 = int_to_ptr.vmem [resolvable:$true] %s844
          %s846 = sshll.u32 %s842, 4
          %s847 = int_to_ptr.hbm [resolvable:$true] %s846
          %849 = dma.vmem_to_hbm [thread:$0]  %s845, 128, %s847, %s831
        $region56: #{tpu_custom_call.1} parent=27 // pred_fallthru
          _
      $region28: #{tpu_custom_call.1} parent=5 // pred_fallthru
        _
      %p850 = scmp.le.s32.totalorder 2, %s14
      // Predicated region
      $region57: #{tpu_custom_call.1} parent=5 // pred_check
        %p851 = pneg %p850
      $region58: #{tpu_custom_call.1} parent=5 // pred_check_branch
        %853 = sbr.rel (%p851) target = $region60
      $region59: #{tpu_custom_call.1} parent=5 // pred_region
        %s854 = ssub.s32 %s14, 2
        // Predicated region
        $region61: #{tpu_custom_call.1} parent=59 // pred_check
          %p855 = pneg %p99
        $region62: #{tpu_custom_call.1} parent=59 // pred_check_branch
          %857 = sbr.rel (%p855) target = $region64
        $region63: #{tpu_custom_call.1} parent=59 // pred_region
          %s858 = sand.u32 %s84, 1
          %s859 = scalar_lea.sflag [#allocation9], %s858
          %s860 = sand.u32 %s84, 1
          %s861 = smul.addr %s860, 8
          %s862 = scalar_lea.vmem [#allocation8], %s861
          %864 = dma.done %s859, 128
        $region64: #{tpu_custom_call.1} parent=59 // pred_fallthru
          _
      $region60: #{tpu_custom_call.1} parent=5 // pred_fallthru
        _
    $region6: #{tpu_custom_call.1} parent=1 // loop_footer
      %s18 = sadd.s32 1, %s14
    $region7: #{tpu_custom_call.1} parent=1 // loop_footer_branch
      %13 = sbr.rel target = $region3
    $region8: #{tpu_custom_call.1} parent=1 // loop_exit
      _
    %865 = vsyncpa [#allocation9], 1
    %s866 = scalar_lea.sflag [#allocation9], 1
    %867 = vsyncpa %s866, 1
  %868 = vsyncmov [#allocation6]
  %s869 = vpop.sfrf %868
  %p870 = scmp.eq.s32.totalorder %s869, 0
  %p871 = pneg %p870
  %873 = shalt.err (%p871)
  %s874 = scalar_lea.sflag [#allocation6], 1
  %875 = vsyncmov %s874
  %s876 = vpop.sfrf %875
  %p877 = scmp.eq.s32.totalorder %s876, 0
  %p878 = pneg %p877
  %880 = shalt.err (%p878)
  %881 = vsyncmov [#allocation7]
  %s882 = vpop.sfrf %881
  %p883 = scmp.eq.s32.totalorder %s882, 0
  %p884 = pneg %p883
  %886 = shalt.err (%p884)
  %s887 = scalar_lea.sflag [#allocation7], 1
  %888 = vsyncmov %s887
  %s889 = vpop.sfrf %888
  %p890 = scmp.eq.s32.totalorder %s889, 0
  %p891 = pneg %p890
  %893 = shalt.err (%p891)

</llo_original>
